<compile_context>
chip_gen: v6e
topology: v6e:2x2x1
jax: 0.10.0
libtpu: 0.0.40
codegen_flags: <defaults>
</compile_context>

<pallas_src>
import jax
import jax.numpy as jnp
from jax.experimental import pallas as pl
from jax.experimental.pallas import tpu as pltpu


# ----------------------------------------------------------------------------
# Kernel (closure over the static B, T so the unrolled slices stay static)
# ----------------------------------------------------------------------------
def _make_kernel(B, T):
    def coordnet_kernel(
        x_ref,                  # (T*B, D)   time-major rows (row = t*B + b), bf16
        w1_ref, b1_ref,         # (D, H) bf16, (1, H) f32      FC1
        g_ref, bln_ref,         # (1, H), (1, H) f32           LayerNorm affine
        wih_ref, bih_ref,       # (H, 6H) bf16, (1, 6H) f32    fused [fwd|bwd] input path
        whh_f_ref, whh_b_ref,   # (H, 3H), (H, 3H) f32         recurrent weights
        bhn_f_ref, bhn_b_ref,   # (1, H), (1, H) f32           b_hn (must stay inside r*(.))
        out_ref,                # (T*B, 2H)  relu(bidirectional GRU output), time-major
    ):
        H = w1_ref.shape[1]
        H3 = 3 * H

        # ---- FC1 + ReLU + LayerNorm, all T*B rows in one MXU pass (bf16 in, f32 acc)
        h1 = jnp.dot(x_ref[...], w1_ref[...],
                     preferred_element_type=jnp.float32) + b1_ref[...]
        h1 = jnp.maximum(h1, 0.0)
        mu = jnp.mean(h1, axis=-1, keepdims=True)
        var = jnp.mean((h1 - mu) ** 2, axis=-1, keepdims=True)
        ln = (h1 - mu) * jax.lax.rsqrt(var + 1e-5) * g_ref[...] + bln_ref[...]

        # ---- hoisted input-path gates for BOTH directions: (T*B, 6H), 2-D, time-major.
        # Columns 0:3H = fwd [r|z|n], 3H:6H = bwd [r|z|n].  The r/z halves of the bias
        # already contain b_hr+b_ir / b_hz+b_iz (folded in prepare_params).
        gx = jnp.dot(ln.astype(wih_ref.dtype), wih_ref[...],
                     preferred_element_type=jnp.float32) + bih_ref[...]

        # Loop-invariant weights (single load, hoisted out of the unrolled loop).
        whh_f = whh_f_ref[...]
        whh_b = whh_b_ref[...]
        bhn_f = bhn_f_ref[...]
        bhn_b = bhn_b_ref[...]

        def gru_step(gi, h, whh, bhn):
            # PyTorch gate order along the 3H axis: [r | z | n];
            # n = tanh(gx_n + b_in + r * (W_hn h + b_hn)); h' = n + z*(h - n).
            gh = jnp.dot(h, whh, preferred_element_type=jnp.float32)
            r = jax.nn.sigmoid(gi[:, 0:H] + gh[:, 0:H])
            z = jax.nn.sigmoid(gi[:, H:2 * H] + gh[:, H:2 * H])
            n = jnp.tanh(gi[:, 2 * H:] + r * (gh[:, 2 * H:] + bhn))
            return n + z * (h - n)

        # ---- bidirectional recurrence, fully unrolled (static, small T); the two
        # directions are independent register-carried chains that hide each
        # other's MXU/EUP latency.  No stores inside the loop.
        h_f = jnp.zeros((B, H), jnp.float32)
        h_b = jnp.zeros((B, H), jnp.float32)
        outs_f = [None] * T
        outs_b = [None] * T
        for t in range(T):
            tb = T - 1 - t
            gi_f = gx[t * B:(t + 1) * B, 0:H3]     # static contiguous row block
            gi_b = gx[tb * B:(tb + 1) * B, H3:]    # static contiguous row block
            h_f = gru_step(gi_f, h_f, whh_f, bhn_f)
            h_b = gru_step(gi_b, h_b, whh_b, bhn_b)
            outs_f[t] = h_f
            outs_b[tb] = h_b

        # ---- one bulk store: rows are time-major, columns [fwd | bwd]; final ReLU here
        rows = [jnp.concatenate([outs_f[t], outs_b[t]], axis=1) for t in range(T)]
        out_ref[...] = jnp.maximum(jnp.concatenate(rows, axis=0), 0.0)

    return coordnet_kernel


# ----------------------------------------------------------------------------
# One-time parameter preprocessing (hoisted out of the per-call wrapper)
# ----------------------------------------------------------------------------
def prepare_params(params):
    (w1, b1, g, b_ln,
     wih_f, whh_f, bih_f, bhh_f,
     wih_b, whh_b, bih_b, bhh_b) = params
    H = w1.shape[1]

    def fold(bih, bhh):
        # Fold b_hr, b_hz into the hoisted input-path bias; b_in stays as-is
        # (b_hn must remain inside r*(W_hn h + b_hn) per the PyTorch GRU formula).
        return jnp.concatenate([bih[:2 * H] + bhh[:2 * H], bih[2 * H:]])

    wih_cat = jnp.concatenate([wih_f, wih_b], axis=1).astype(jnp.bfloat16)   # (H, 6H)
    bih_cat = jnp.concatenate([fold(bih_f, bhh_f),
                               fold(bih_b, bhh_b)]).reshape(1, 6 * H)        # (1, 6H)
    return dict(
        w1=w1.astype(jnp.bfloat16),
        b1=b1.reshape(1, H),
        g=g.reshape(1, H),
        b_ln=b_ln.reshape(1, H),
        wih=wih_cat,
        bih=bih_cat,
        whh_f=whh_f,                     # f32: stays on the serial recurrent path
        whh_b=whh_b,
        bhn_f=bhh_f[2 * H:].reshape(1, H),
        bhn_b=bhh_b[2 * H:].reshape(1, H),
    )


# ----------------------------------------------------------------------------
# Wrapper
# ----------------------------------------------------------------------------
def coordnet_forward(thought_comb, prep):
    """thought_comb: (B, T, D) with B=n_agent, T=batch_size, D=rnn_hidden_dim."""
    B, T, D = thought_comb.shape
    H = prep["w1"].shape[1]

    # Time-major flattened rows (row = t*B + b), done on the contiguous HBM array
    # in the wrapper so the kernel sees plain 2-D slabs and never relayouts.
    x_tm = jnp.transpose(thought_comb, (1, 0, 2)).reshape(T * B, D).astype(jnp.bfloat16)

    vmem = pl.BlockSpec(memory_space=pltpu.MemorySpace.VMEM)
    out = pl.pallas_call(
        _make_kernel(B, T),
        out_shape=jax.ShapeDtypeStruct((T * B, 2 * H), jnp.float32),
        in_specs=[vmem] * 11,
        out_specs=vmem,
    )(
        x_tm,
        prep["w1"], prep["b1"], prep["g"], prep["b_ln"],
        prep["wih"], prep["bih"],
        prep["whh_f"], prep["whh_b"],
        prep["bhn_f"], prep["bhn_b"],
    )
    # (T*B, 2H) -> (B, T, 2H); cheap wrapper-side metadata/transpose on a tiny array.
    return out.reshape(T, B, 2 * H).transpose(1, 0, 2)


# ----------------------------------------------------------------------------
# Pure-JAX f32 reference (for correctness check only)
# ----------------------------------------------------------------------------
def coordnet_reference(x, params):
    (w1, b1, g, b_ln,
     wih_f, whh_f, bih_f, bhh_f,
     wih_b, whh_b, bih_b, bhh_b) = params
    H = w1.shape[1]
    B, T, _ = x.shape

    h1 = jax.nn.relu(x.astype(jnp.float32) @ w1 + b1)
    mu = h1.mean(-1, keepdims=True)
    var = ((h1 - mu) ** 2).mean(-1, keepdims=True)
    ln = (h1 - mu) / jnp.sqrt(var + 1e-5) * g + b_ln                 # (B,T,H)
    ln_t = jnp.transpose(ln, (1, 0, 2))                              # (T,B,H)

    def cell(h, x_t, wih, whh, bih, bhh):
        gx = x_t @ wih + bih
        gh = h @ whh + bhh
        r = jax.nn.sigmoid(gx[:, :H] + gh[:, :H])
        z = jax.nn.sigmoid(gx[:, H:2 * H] + gh[:, H:2 * H])
        n = jnp.tanh(gx[:, 2 * H:] + r * gh[:, 2 * H:])
        return (1.0 - z) * n + z * h

    def step_f(h, xt):
        hn = cell(h, xt, wih_f, whh_f, bih_f, bhh_f)
        return hn, hn

    def step_b(h, xt):
        hn = cell(h, xt, wih_b, whh_b, bih_b, bhh_b)
        return hn, hn

    h0 = jnp.zeros((B, H), jnp.float32)
    _, ys_f = jax.lax.scan(step_f, h0, ln_t)
    _, ys_b = jax.lax.scan(step_b, h0, ln_t[::-1])
    ys_b = ys_b[::-1]
    out = jnp.concatenate([ys_f, ys_b], axis=-1)                     # (T,B,2H)
    return jax.nn.relu(jnp.transpose(out, (1, 0, 2)))                # (B,T,2H)


# ----------------------------------------------------------------------------
# Deterministic parameter init (PyTorch-style uniform bounds, synthetic)
# ----------------------------------------------------------------------------
def init_params(key, D, H):
    ks = jax.random.split(key, 12)
    u = lambda k, shape, bound: jax.random.uniform(k, shape, jnp.float32, -bound, bound)
    lb, gb = 1.0 / jnp.sqrt(D), 1.0 / jnp.sqrt(H)
    w1 = u(ks[0], (D, H), lb)            # FC1 weight (stored transposed for x @ W)
    b1 = u(ks[1], (H,), lb)
    g = jnp.ones((H,), jnp.float32)      # LayerNorm gamma
    b_ln = jnp.zeros((H,), jnp.float32)  # LayerNorm beta
    wih_f = u(ks[2], (H, 3 * H), gb)     # gate column order: [r | z | n]
    whh_f = u(ks[3], (H, 3 * H), gb)
    bih_f = u(ks[4], (3 * H,), gb)
    bhh_f = u(ks[5], (3 * H,), gb)
    wih_b = u(ks[6], (H, 3 * H), gb)
    whh_b = u(ks[7], (H, 3 * H), gb)
    bih_b = u(ks[8], (3 * H,), gb)
    bhh_b = u(ks[9], (3 * H,), gb)
    return (w1, b1, g, b_ln,
            wih_f, whh_f, bih_f, bhh_f,
            wih_b, whh_b, bih_b, bhh_b)


if __name__ == "__main__":
    key = jax.random.PRNGKey(0)
    n_agent, batch_size, thought_dim = 4, 8, 32      # (B, T, D) in our layout
    hidden = thought_dim // 2

    k_x, k_p = jax.random.split(key)
    thought_comb = jax.random.normal(k_x, (n_agent, batch_size, thought_dim), jnp.float32)
    params = init_params(k_p, thought_dim, hidden)
    prep = prepare_params(params)                    # one-time preprocessing

    forward = jax.jit(coordnet_forward)
    out = jax.block_until_ready(forward(thought_comb, prep))
    assert out.shape == (n_agent, batch_size, 2 * hidden), out.shape

    ref = jax.block_until_ready(coordnet_reference(thought_comb, params))
    # Tolerance accounts for bf16 MXU operands on the two hoisted matmuls
    # (gate math, LayerNorm statistics and the carried GRU state stay f32).
    err = float(jnp.max(jnp.abs(out - ref)))
    assert jnp.allclose(out, ref, rtol=2.5e-2, atol=2.5e-2), err

    print("KERNEL_OK")
</pallas_src>

<mosaic_0001>
module attributes {stable_mosaic.version = 11 : i64} {
  func.func @coordnet_kernel(%arg0: memref<32x32xbf16, #tpu.memory_space<vmem>>, %arg1: memref<32x16xbf16, #tpu.memory_space<vmem>>, %arg2: memref<1x16xf32, #tpu.memory_space<vmem>>, %arg3: memref<1x16xf32, #tpu.memory_space<vmem>>, %arg4: memref<1x16xf32, #tpu.memory_space<vmem>>, %arg5: memref<16x96xbf16, #tpu.memory_space<vmem>>, %arg6: memref<1x96xf32, #tpu.memory_space<vmem>>, %arg7: memref<16x48xf32, #tpu.memory_space<vmem>>, %arg8: memref<16x48xf32, #tpu.memory_space<vmem>>, %arg9: memref<1x16xf32, #tpu.memory_space<vmem>>, %arg10: memref<1x16xf32, #tpu.memory_space<vmem>>, %arg11: memref<32x32xf32, #tpu.memory_space<vmem>>) attributes {dimension_semantics = [], scalar_prefetch = 0 : i64, scratch_operands = 0 : i64, tpu.core_type = #tpu.core_type<tc>} {
    %c0 = arith.constant 0 : index
    %c0_0 = arith.constant 0 : index
    %0 = vector.load %arg0[%c0, %c0_0] : memref<32x32xbf16, #tpu.memory_space<vmem>>, vector<32x32xbf16>
    %c0_1 = arith.constant 0 : index
    %c0_2 = arith.constant 0 : index
    %1 = vector.load %arg1[%c0_1, %c0_2] : memref<32x16xbf16, #tpu.memory_space<vmem>>, vector<32x16xbf16>
    %cst = arith.constant dense<0.000000e+00> : vector<32x16xf32>
    %2 = tpu.matmul %0, %1, %cst {dimension_numbers = #tpu.dot_dimension_numbers<[1], [0], [0], [1], [0, 0, 1, 1], [], []>} : vector<32x32xbf16>, vector<32x16xbf16>, vector<32x16xf32> -> vector<32x16xf32>
    %c0_3 = arith.constant 0 : index
    %c0_4 = arith.constant 0 : index
    %3 = vector.load %arg2[%c0_3, %c0_4] : memref<1x16xf32, #tpu.memory_space<vmem>>, vector<1x16xf32>
    %4 = vector.broadcast %3 : vector<1x16xf32> to vector<32x16xf32>
    %5 = arith.addf %2, %4 : vector<32x16xf32>
    %cst_5 = arith.constant 0.000000e+00 : f32
    %6 = vector.broadcast %cst_5 : f32 to vector<32x16xf32>
    %7 = arith.maximumf %5, %6 : vector<32x16xf32>
    %cst_6 = arith.constant dense<0.000000e+00> : vector<32xf32>
    %8 = vector.multi_reduction <add>, %7, %cst_6 [1] : vector<32x16xf32> to vector<32xf32>
    %9 = vector.shape_cast %8 : vector<32xf32> to vector<32x1xf32>
    %cst_7 = arith.constant 1.600000e+01 : f32
    %10 = vector.broadcast %cst_7 : f32 to vector<32x1xf32>
    %11 = arith.divf %9, %10 : vector<32x1xf32>
    %12 = vector.broadcast %11 : vector<32x1xf32> to vector<32x16xf32>
    %13 = arith.subf %7, %12 : vector<32x16xf32>
    %14 = arith.mulf %13, %13 : vector<32x16xf32>
    %cst_8 = arith.constant dense<0.000000e+00> : vector<32xf32>
    %15 = vector.multi_reduction <add>, %14, %cst_8 [1] : vector<32x16xf32> to vector<32xf32>
    %16 = vector.shape_cast %15 : vector<32xf32> to vector<32x1xf32>
    %cst_9 = arith.constant 1.600000e+01 : f32
    %17 = vector.broadcast %cst_9 : f32 to vector<32x1xf32>
    %18 = arith.divf %16, %17 : vector<32x1xf32>
    %19 = vector.broadcast %11 : vector<32x1xf32> to vector<32x16xf32>
    %20 = arith.subf %7, %19 : vector<32x16xf32>
    %cst_10 = arith.constant 9.99999974E-6 : f32
    %21 = vector.broadcast %cst_10 : f32 to vector<32x1xf32>
    %22 = arith.addf %18, %21 : vector<32x1xf32>
    %23 = math.rsqrt %22 : vector<32x1xf32>
    %24 = vector.broadcast %23 : vector<32x1xf32> to vector<32x16xf32>
    %25 = arith.mulf %20, %24 : vector<32x16xf32>
    %c0_11 = arith.constant 0 : index
    %c0_12 = arith.constant 0 : index
    %26 = vector.load %arg3[%c0_11, %c0_12] : memref<1x16xf32, #tpu.memory_space<vmem>>, vector<1x16xf32>
    %27 = vector.broadcast %26 : vector<1x16xf32> to vector<32x16xf32>
    %28 = arith.mulf %25, %27 : vector<32x16xf32>
    %c0_13 = arith.constant 0 : index
    %c0_14 = arith.constant 0 : index
    %29 = vector.load %arg4[%c0_13, %c0_14] : memref<1x16xf32, #tpu.memory_space<vmem>>, vector<1x16xf32>
    %30 = vector.broadcast %29 : vector<1x16xf32> to vector<32x16xf32>
    %31 = arith.addf %28, %30 : vector<32x16xf32>
    %32 = arith.truncf %31 : vector<32x16xf32> to vector<32x16xbf16>
    %c0_15 = arith.constant 0 : index
    %c0_16 = arith.constant 0 : index
    %33 = vector.load %arg5[%c0_15, %c0_16] : memref<16x96xbf16, #tpu.memory_space<vmem>>, vector<16x96xbf16>
    %cst_17 = arith.constant dense<0.000000e+00> : vector<32x96xf32>
    %34 = tpu.matmul %32, %33, %cst_17 {dimension_numbers = #tpu.dot_dimension_numbers<[1], [0], [0], [1], [0, 0, 1, 1], [], []>} : vector<32x16xbf16>, vector<16x96xbf16>, vector<32x96xf32> -> vector<32x96xf32>
    %c0_18 = arith.constant 0 : index
    %c0_19 = arith.constant 0 : index
    %35 = vector.load %arg6[%c0_18, %c0_19] : memref<1x96xf32, #tpu.memory_space<vmem>>, vector<1x96xf32>
    %36 = vector.broadcast %35 : vector<1x96xf32> to vector<32x96xf32>
    %37 = arith.addf %34, %36 : vector<32x96xf32>
    %c0_20 = arith.constant 0 : index
    %c0_21 = arith.constant 0 : index
    %38 = vector.load %arg7[%c0_20, %c0_21] : memref<16x48xf32, #tpu.memory_space<vmem>>, vector<16x48xf32>
    %c0_22 = arith.constant 0 : index
    %c0_23 = arith.constant 0 : index
    %39 = vector.load %arg8[%c0_22, %c0_23] : memref<16x48xf32, #tpu.memory_space<vmem>>, vector<16x48xf32>
    %c0_24 = arith.constant 0 : index
    %c0_25 = arith.constant 0 : index
    %40 = vector.load %arg9[%c0_24, %c0_25] : memref<1x16xf32, #tpu.memory_space<vmem>>, vector<1x16xf32>
    %c0_26 = arith.constant 0 : index
    %c0_27 = arith.constant 0 : index
    %41 = vector.load %arg10[%c0_26, %c0_27] : memref<1x16xf32, #tpu.memory_space<vmem>>, vector<1x16xf32>
    %cst_28 = arith.constant 0.000000e+00 : f32
    %42 = vector.broadcast %cst_28 : f32 to vector<4x16xf32>
    %cst_29 = arith.constant 0.000000e+00 : f32
    %43 = vector.broadcast %cst_29 : f32 to vector<4x16xf32>
    %44 = vector.extract_strided_slice %37 {offsets = [0, 0], sizes = [4, 48], strides = [1, 1]} : vector<32x96xf32> to vector<4x48xf32>
    %45 = vector.extract_strided_slice %37 {offsets = [28, 48], sizes = [4, 48], strides = [1, 1]} : vector<32x96xf32> to vector<4x48xf32>
    %cst_30 = arith.constant dense<0.000000e+00> : vector<4x48xf32>
    %46 = tpu.matmul %42, %38, %cst_30 {dimension_numbers = #tpu.dot_dimension_numbers<[1], [0], [0], [1], [0, 0, 1, 1], [], []>} : vector<4x16xf32>, vector<16x48xf32>, vector<4x48xf32> -> vector<4x48xf32>
    %47 = vector.extract_strided_slice %44 {offsets = [0, 0], sizes = [4, 16], strides = [1, 1]} : vector<4x48xf32> to vector<4x16xf32>
    %48 = vector.extract_strided_slice %46 {offsets = [0, 0], sizes = [4, 16], strides = [1, 1]} : vector<4x48xf32> to vector<4x16xf32>
    %49 = arith.addf %47, %48 : vector<4x16xf32>
    %50 = arith.negf %49 : vector<4x16xf32>
    %51 = math.exp %50 : vector<4x16xf32>
    %cst_31 = arith.constant 1.000000e+00 : f32
    %52 = vector.broadcast %cst_31 : f32 to vector<4x16xf32>
    %53 = arith.addf %52, %51 : vector<4x16xf32>
    %54 = arith.divf %52, %53 : vector<4x16xf32>
    %55 = vector.extract_strided_slice %44 {offsets = [0, 16], sizes = [4, 16], strides = [1, 1]} : vector<4x48xf32> to vector<4x16xf32>
    %56 = vector.extract_strided_slice %46 {offsets = [0, 16], sizes = [4, 16], strides = [1, 1]} : vector<4x48xf32> to vector<4x16xf32>
    %57 = arith.addf %55, %56 : vector<4x16xf32>
    %58 = arith.negf %57 : vector<4x16xf32>
    %59 = math.exp %58 : vector<4x16xf32>
    %cst_32 = arith.constant 1.000000e+00 : f32
    %60 = vector.broadcast %cst_32 : f32 to vector<4x16xf32>
    %61 = arith.addf %60, %59 : vector<4x16xf32>
    %62 = arith.divf %60, %61 : vector<4x16xf32>
    %63 = vector.extract_strided_slice %44 {offsets = [0, 32], sizes = [4, 16], strides = [1, 1]} : vector<4x48xf32> to vector<4x16xf32>
    %64 = vector.extract_strided_slice %46 {offsets = [0, 32], sizes = [4, 16], strides = [1, 1]} : vector<4x48xf32> to vector<4x16xf32>
    %65 = vector.broadcast %40 : vector<1x16xf32> to vector<4x16xf32>
    %66 = arith.addf %64, %65 : vector<4x16xf32>
    %67 = arith.mulf %54, %66 : vector<4x16xf32>
    %68 = arith.addf %63, %67 : vector<4x16xf32>
    %69 = math.tanh %68 : vector<4x16xf32>
    %70 = arith.subf %42, %69 : vector<4x16xf32>
    %71 = arith.mulf %62, %70 : vector<4x16xf32>
    %72 = arith.addf %69, %71 : vector<4x16xf32>
    %cst_33 = arith.constant dense<0.000000e+00> : vector<4x48xf32>
    %73 = tpu.matmul %43, %39, %cst_33 {dimension_numbers = #tpu.dot_dimension_numbers<[1], [0], [0], [1], [0, 0, 1, 1], [], []>} : vector<4x16xf32>, vector<16x48xf32>, vector<4x48xf32> -> vector<4x48xf32>
    %74 = vector.extract_strided_slice %45 {offsets = [0, 0], sizes = [4, 16], strides = [1, 1]} : vector<4x48xf32> to vector<4x16xf32>
    %75 = vector.extract_strided_slice %73 {offsets = [0, 0], sizes = [4, 16], strides = [1, 1]} : vector<4x48xf32> to vector<4x16xf32>
    %76 = arith.addf %74, %75 : vector<4x16xf32>
    %77 = arith.negf %76 : vector<4x16xf32>
    %78 = math.exp %77 : vector<4x16xf32>
    %cst_34 = arith.constant 1.000000e+00 : f32
    %79 = vector.broadcast %cst_34 : f32 to vector<4x16xf32>
    %80 = arith.addf %79, %78 : vector<4x16xf32>
    %81 = arith.divf %79, %80 : vector<4x16xf32>
    %82 = vector.extract_strided_slice %45 {offsets = [0, 16], sizes = [4, 16], strides = [1, 1]} : vector<4x48xf32> to vector<4x16xf32>
    %83 = vector.extract_strided_slice %73 {offsets = [0, 16], sizes = [4, 16], strides = [1, 1]} : vector<4x48xf32> to vector<4x16xf32>
    %84 = arith.addf %82, %83 : vector<4x16xf32>
    %85 = arith.negf %84 : vector<4x16xf32>
    %86 = math.exp %85 : vector<4x16xf32>
    %cst_35 = arith.constant 1.000000e+00 : f32
    %87 = vector.broadcast %cst_35 : f32 to vector<4x16xf32>
    %88 = arith.addf %87, %86 : vector<4x16xf32>
    %89 = arith.divf %87, %88 : vector<4x16xf32>
    %90 = vector.extract_strided_slice %45 {offsets = [0, 32], sizes = [4, 16], strides = [1, 1]} : vector<4x48xf32> to vector<4x16xf32>
    %91 = vector.extract_strided_slice %73 {offsets = [0, 32], sizes = [4, 16], strides = [1, 1]} : vector<4x48xf32> to vector<4x16xf32>
    %92 = vector.broadcast %41 : vector<1x16xf32> to vector<4x16xf32>
    %93 = arith.addf %91, %92 : vector<4x16xf32>
    %94 = arith.mulf %81, %93 : vector<4x16xf32>
    %95 = arith.addf %90, %94 : vector<4x16xf32>
    %96 = math.tanh %95 : vector<4x16xf32>
    %97 = arith.subf %43, %96 : vector<4x16xf32>
    %98 = arith.mulf %89, %97 : vector<4x16xf32>
    %99 = arith.addf %96, %98 : vector<4x16xf32>
    %100 = vector.extract_strided_slice %37 {offsets = [4, 0], sizes = [4, 48], strides = [1, 1]} : vector<32x96xf32> to vector<4x48xf32>
    %101 = vector.extract_strided_slice %37 {offsets = [24, 48], sizes = [4, 48], strides = [1, 1]} : vector<32x96xf32> to vector<4x48xf32>
    %cst_36 = arith.constant dense<0.000000e+00> : vector<4x48xf32>
    %102 = tpu.matmul %72, %38, %cst_36 {dimension_numbers = #tpu.dot_dimension_numbers<[1], [0], [0], [1], [0, 0, 1, 1], [], []>} : vector<4x16xf32>, vector<16x48xf32>, vector<4x48xf32> -> vector<4x48xf32>
    %103 = vector.extract_strided_slice %100 {offsets = [0, 0], sizes = [4, 16], strides = [1, 1]} : vector<4x48xf32> to vector<4x16xf32>
    %104 = vector.extract_strided_slice %102 {offsets = [0, 0], sizes = [4, 16], strides = [1, 1]} : vector<4x48xf32> to vector<4x16xf32>
    %105 = arith.addf %103, %104 : vector<4x16xf32>
    %106 = arith.negf %105 : vector<4x16xf32>
    %107 = math.exp %106 : vector<4x16xf32>
    %cst_37 = arith.constant 1.000000e+00 : f32
    %108 = vector.broadcast %cst_37 : f32 to vector<4x16xf32>
    %109 = arith.addf %108, %107 : vector<4x16xf32>
    %110 = arith.divf %108, %109 : vector<4x16xf32>
    %111 = vector.extract_strided_slice %100 {offsets = [0, 16], sizes = [4, 16], strides = [1, 1]} : vector<4x48xf32> to vector<4x16xf32>
    %112 = vector.extract_strided_slice %102 {offsets = [0, 16], sizes = [4, 16], strides = [1, 1]} : vector<4x48xf32> to vector<4x16xf32>
    %113 = arith.addf %111, %112 : vector<4x16xf32>
    %114 = arith.negf %113 : vector<4x16xf32>
    %115 = math.exp %114 : vector<4x16xf32>
    %cst_38 = arith.constant 1.000000e+00 : f32
    %116 = vector.broadcast %cst_38 : f32 to vector<4x16xf32>
    %117 = arith.addf %116, %115 : vector<4x16xf32>
    %118 = arith.divf %116, %117 : vector<4x16xf32>
    %119 = vector.extract_strided_slice %100 {offsets = [0, 32], sizes = [4, 16], strides = [1, 1]} : vector<4x48xf32> to vector<4x16xf32>
    %120 = vector.extract_strided_slice %102 {offsets = [0, 32], sizes = [4, 16], strides = [1, 1]} : vector<4x48xf32> to vector<4x16xf32>
    %121 = vector.broadcast %40 : vector<1x16xf32> to vector<4x16xf32>
    %122 = arith.addf %120, %121 : vector<4x16xf32>
    %123 = arith.mulf %110, %122 : vector<4x16xf32>
    %124 = arith.addf %119, %123 : vector<4x16xf32>
    %125 = math.tanh %124 : vector<4x16xf32>
    %126 = arith.subf %72, %125 : vector<4x16xf32>
    %127 = arith.mulf %118, %126 : vector<4x16xf32>
    %128 = arith.addf %125, %127 : vector<4x16xf32>
    %cst_39 = arith.constant dense<0.000000e+00> : vector<4x48xf32>
    %129 = tpu.matmul %99, %39, %cst_39 {dimension_numbers = #tpu.dot_dimension_numbers<[1], [0], [0], [1], [0, 0, 1, 1], [], []>} : vector<4x16xf32>, vector<16x48xf32>, vector<4x48xf32> -> vector<4x48xf32>
    %130 = vector.extract_strided_slice %101 {offsets = [0, 0], sizes = [4, 16], strides = [1, 1]} : vector<4x48xf32> to vector<4x16xf32>
    %131 = vector.extract_strided_slice %129 {offsets = [0, 0], sizes = [4, 16], strides = [1, 1]} : vector<4x48xf32> to vector<4x16xf32>
    %132 = arith.addf %130, %131 : vector<4x16xf32>
    %133 = arith.negf %132 : vector<4x16xf32>
    %134 = math.exp %133 : vector<4x16xf32>
    %cst_40 = arith.constant 1.000000e+00 : f32
    %135 = vector.broadcast %cst_40 : f32 to vector<4x16xf32>
    %136 = arith.addf %135, %134 : vector<4x16xf32>
    %137 = arith.divf %135, %136 : vector<4x16xf32>
    %138 = vector.extract_strided_slice %101 {offsets = [0, 16], sizes = [4, 16], strides = [1, 1]} : vector<4x48xf32> to vector<4x16xf32>
    %139 = vector.extract_strided_slice %129 {offsets = [0, 16], sizes = [4, 16], strides = [1, 1]} : vector<4x48xf32> to vector<4x16xf32>
    %140 = arith.addf %138, %139 : vector<4x16xf32>
    %141 = arith.negf %140 : vector<4x16xf32>
    %142 = math.exp %141 : vector<4x16xf32>
    %cst_41 = arith.constant 1.000000e+00 : f32
    %143 = vector.broadcast %cst_41 : f32 to vector<4x16xf32>
    %144 = arith.addf %143, %142 : vector<4x16xf32>
    %145 = arith.divf %143, %144 : vector<4x16xf32>
    %146 = vector.extract_strided_slice %101 {offsets = [0, 32], sizes = [4, 16], strides = [1, 1]} : vector<4x48xf32> to vector<4x16xf32>
    %147 = vector.extract_strided_slice %129 {offsets = [0, 32], sizes = [4, 16], strides = [1, 1]} : vector<4x48xf32> to vector<4x16xf32>
    %148 = vector.broadcast %41 : vector<1x16xf32> to vector<4x16xf32>
    %149 = arith.addf %147, %148 : vector<4x16xf32>
    %150 = arith.mulf %137, %149 : vector<4x16xf32>
    %151 = arith.addf %146, %150 : vector<4x16xf32>
    %152 = math.tanh %151 : vector<4x16xf32>
    %153 = arith.subf %99, %152 : vector<4x16xf32>
    %154 = arith.mulf %145, %153 : vector<4x16xf32>
    %155 = arith.addf %152, %154 : vector<4x16xf32>
    %156 = vector.extract_strided_slice %37 {offsets = [8, 0], sizes = [4, 48], strides = [1, 1]} : vector<32x96xf32> to vector<4x48xf32>
    %157 = vector.extract_strided_slice %37 {offsets = [20, 48], sizes = [4, 48], strides = [1, 1]} : vector<32x96xf32> to vector<4x48xf32>
    %cst_42 = arith.constant dense<0.000000e+00> : vector<4x48xf32>
    %158 = tpu.matmul %128, %38, %cst_42 {dimension_numbers = #tpu.dot_dimension_numbers<[1], [0], [0], [1], [0, 0, 1, 1], [], []>} : vector<4x16xf32>, vector<16x48xf32>, vector<4x48xf32> -> vector<4x48xf32>
    %159 = vector.extract_strided_slice %156 {offsets = [0, 0], sizes = [4, 16], strides = [1, 1]} : vector<4x48xf32> to vector<4x16xf32>
    %160 = vector.extract_strided_slice %158 {offsets = [0, 0], sizes = [4, 16], strides = [1, 1]} : vector<4x48xf32> to vector<4x16xf32>
    %161 = arith.addf %159, %160 : vector<4x16xf32>
    %162 = arith.negf %161 : vector<4x16xf32>
    %163 = math.exp %162 : vector<4x16xf32>
    %cst_43 = arith.constant 1.000000e+00 : f32
    %164 = vector.broadcast %cst_43 : f32 to vector<4x16xf32>
    %165 = arith.addf %164, %163 : vector<4x16xf32>
    %166 = arith.divf %164, %165 : vector<4x16xf32>
    %167 = vector.extract_strided_slice %156 {offsets = [0, 16], sizes = [4, 16], strides = [1, 1]} : vector<4x48xf32> to vector<4x16xf32>
    %168 = vector.extract_strided_slice %158 {offsets = [0, 16], sizes = [4, 16], strides = [1, 1]} : vector<4x48xf32> to vector<4x16xf32>
    %169 = arith.addf %167, %168 : vector<4x16xf32>
    %170 = arith.negf %169 : vector<4x16xf32>
    %171 = math.exp %170 : vector<4x16xf32>
    %cst_44 = arith.constant 1.000000e+00 : f32
    %172 = vector.broadcast %cst_44 : f32 to vector<4x16xf32>
    %173 = arith.addf %172, %171 : vector<4x16xf32>
    %174 = arith.divf %172, %173 : vector<4x16xf32>
    %175 = vector.extract_strided_slice %156 {offsets = [0, 32], sizes = [4, 16], strides = [1, 1]} : vector<4x48xf32> to vector<4x16xf32>
    %176 = vector.extract_strided_slice %158 {offsets = [0, 32], sizes = [4, 16], strides = [1, 1]} : vector<4x48xf32> to vector<4x16xf32>
    %177 = vector.broadcast %40 : vector<1x16xf32> to vector<4x16xf32>
    %178 = arith.addf %176, %177 : vector<4x16xf32>
    %179 = arith.mulf %166, %178 : vector<4x16xf32>
    %180 = arith.addf %175, %179 : vector<4x16xf32>
    %181 = math.tanh %180 : vector<4x16xf32>
    %182 = arith.subf %128, %181 : vector<4x16xf32>
    %183 = arith.mulf %174, %182 : vector<4x16xf32>
    %184 = arith.addf %181, %183 : vector<4x16xf32>
    %cst_45 = arith.constant dense<0.000000e+00> : vector<4x48xf32>
    %185 = tpu.matmul %155, %39, %cst_45 {dimension_numbers = #tpu.dot_dimension_numbers<[1], [0], [0], [1], [0, 0, 1, 1], [], []>} : vector<4x16xf32>, vector<16x48xf32>, vector<4x48xf32> -> vector<4x48xf32>
    %186 = vector.extract_strided_slice %157 {offsets = [0, 0], sizes = [4, 16], strides = [1, 1]} : vector<4x48xf32> to vector<4x16xf32>
    %187 = vector.extract_strided_slice %185 {offsets = [0, 0], sizes = [4, 16], strides = [1, 1]} : vector<4x48xf32> to vector<4x16xf32>
    %188 = arith.addf %186, %187 : vector<4x16xf32>
    %189 = arith.negf %188 : vector<4x16xf32>
    %190 = math.exp %189 : vector<4x16xf32>
    %cst_46 = arith.constant 1.000000e+00 : f32
    %191 = vector.broadcast %cst_46 : f32 to vector<4x16xf32>
    %192 = arith.addf %191, %190 : vector<4x16xf32>
    %193 = arith.divf %191, %192 : vector<4x16xf32>
    %194 = vector.extract_strided_slice %157 {offsets = [0, 16], sizes = [4, 16], strides = [1, 1]} : vector<4x48xf32> to vector<4x16xf32>
    %195 = vector.extract_strided_slice %185 {offsets = [0, 16], sizes = [4, 16], strides = [1, 1]} : vector<4x48xf32> to vector<4x16xf32>
    %196 = arith.addf %194, %195 : vector<4x16xf32>
    %197 = arith.negf %196 : vector<4x16xf32>
    %198 = math.exp %197 : vector<4x16xf32>
    %cst_47 = arith.constant 1.000000e+00 : f32
    %199 = vector.broadcast %cst_47 : f32 to vector<4x16xf32>
    %200 = arith.addf %199, %198 : vector<4x16xf32>
    %201 = arith.divf %199, %200 : vector<4x16xf32>
    %202 = vector.extract_strided_slice %157 {offsets = [0, 32], sizes = [4, 16], strides = [1, 1]} : vector<4x48xf32> to vector<4x16xf32>
    %203 = vector.extract_strided_slice %185 {offsets = [0, 32], sizes = [4, 16], strides = [1, 1]} : vector<4x48xf32> to vector<4x16xf32>
    %204 = vector.broadcast %41 : vector<1x16xf32> to vector<4x16xf32>
    %205 = arith.addf %203, %204 : vector<4x16xf32>
    %206 = arith.mulf %193, %205 : vector<4x16xf32>
    %207 = arith.addf %202, %206 : vector<4x16xf32>
    %208 = math.tanh %207 : vector<4x16xf32>
    %209 = arith.subf %155, %208 : vector<4x16xf32>
    %210 = arith.mulf %201, %209 : vector<4x16xf32>
    %211 = arith.addf %208, %210 : vector<4x16xf32>
    %212 = vector.extract_strided_slice %37 {offsets = [12, 0], sizes = [4, 48], strides = [1, 1]} : vector<32x96xf32> to vector<4x48xf32>
    %213 = vector.extract_strided_slice %37 {offsets = [16, 48], sizes = [4, 48], strides = [1, 1]} : vector<32x96xf32> to vector<4x48xf32>
    %cst_48 = arith.constant dense<0.000000e+00> : vector<4x48xf32>
    %214 = tpu.matmul %184, %38, %cst_48 {dimension_numbers = #tpu.dot_dimension_numbers<[1], [0], [0], [1], [0, 0, 1, 1], [], []>} : vector<4x16xf32>, vector<16x48xf32>, vector<4x48xf32> -> vector<4x48xf32>
    %215 = vector.extract_strided_slice %212 {offsets = [0, 0], sizes = [4, 16], strides = [1, 1]} : vector<4x48xf32> to vector<4x16xf32>
    %216 = vector.extract_strided_slice %214 {offsets = [0, 0], sizes = [4, 16], strides = [1, 1]} : vector<4x48xf32> to vector<4x16xf32>
    %217 = arith.addf %215, %216 : vector<4x16xf32>
    %218 = arith.negf %217 : vector<4x16xf32>
    %219 = math.exp %218 : vector<4x16xf32>
    %cst_49 = arith.constant 1.000000e+00 : f32
    %220 = vector.broadcast %cst_49 : f32 to vector<4x16xf32>
    %221 = arith.addf %220, %219 : vector<4x16xf32>
    %222 = arith.divf %220, %221 : vector<4x16xf32>
    %223 = vector.extract_strided_slice %212 {offsets = [0, 16], sizes = [4, 16], strides = [1, 1]} : vector<4x48xf32> to vector<4x16xf32>
    %224 = vector.extract_strided_slice %214 {offsets = [0, 16], sizes = [4, 16], strides = [1, 1]} : vector<4x48xf32> to vector<4x16xf32>
    %225 = arith.addf %223, %224 : vector<4x16xf32>
    %226 = arith.negf %225 : vector<4x16xf32>
    %227 = math.exp %226 : vector<4x16xf32>
    %cst_50 = arith.constant 1.000000e+00 : f32
    %228 = vector.broadcast %cst_50 : f32 to vector<4x16xf32>
    %229 = arith.addf %228, %227 : vector<4x16xf32>
    %230 = arith.divf %228, %229 : vector<4x16xf32>
    %231 = vector.extract_strided_slice %212 {offsets = [0, 32], sizes = [4, 16], strides = [1, 1]} : vector<4x48xf32> to vector<4x16xf32>
    %232 = vector.extract_strided_slice %214 {offsets = [0, 32], sizes = [4, 16], strides = [1, 1]} : vector<4x48xf32> to vector<4x16xf32>
    %233 = vector.broadcast %40 : vector<1x16xf32> to vector<4x16xf32>
    %234 = arith.addf %232, %233 : vector<4x16xf32>
    %235 = arith.mulf %222, %234 : vector<4x16xf32>
    %236 = arith.addf %231, %235 : vector<4x16xf32>
    %237 = math.tanh %236 : vector<4x16xf32>
    %238 = arith.subf %184, %237 : vector<4x16xf32>
    %239 = arith.mulf %230, %238 : vector<4x16xf32>
    %240 = arith.addf %237, %239 : vector<4x16xf32>
    %cst_51 = arith.constant dense<0.000000e+00> : vector<4x48xf32>
    %241 = tpu.matmul %211, %39, %cst_51 {dimension_numbers = #tpu.dot_dimension_numbers<[1], [0], [0], [1], [0, 0, 1, 1], [], []>} : vector<4x16xf32>, vector<16x48xf32>, vector<4x48xf32> -> vector<4x48xf32>
    %242 = vector.extract_strided_slice %213 {offsets = [0, 0], sizes = [4, 16], strides = [1, 1]} : vector<4x48xf32> to vector<4x16xf32>
    %243 = vector.extract_strided_slice %241 {offsets = [0, 0], sizes = [4, 16], strides = [1, 1]} : vector<4x48xf32> to vector<4x16xf32>
    %244 = arith.addf %242, %243 : vector<4x16xf32>
    %245 = arith.negf %244 : vector<4x16xf32>
    %246 = math.exp %245 : vector<4x16xf32>
    %cst_52 = arith.constant 1.000000e+00 : f32
    %247 = vector.broadcast %cst_52 : f32 to vector<4x16xf32>
    %248 = arith.addf %247, %246 : vector<4x16xf32>
    %249 = arith.divf %247, %248 : vector<4x16xf32>
    %250 = vector.extract_strided_slice %213 {offsets = [0, 16], sizes = [4, 16], strides = [1, 1]} : vector<4x48xf32> to vector<4x16xf32>
    %251 = vector.extract_strided_slice %241 {offsets = [0, 16], sizes = [4, 16], strides = [1, 1]} : vector<4x48xf32> to vector<4x16xf32>
    %252 = arith.addf %250, %251 : vector<4x16xf32>
    %253 = arith.negf %252 : vector<4x16xf32>
    %254 = math.exp %253 : vector<4x16xf32>
    %cst_53 = arith.constant 1.000000e+00 : f32
    %255 = vector.broadcast %cst_53 : f32 to vector<4x16xf32>
    %256 = arith.addf %255, %254 : vector<4x16xf32>
    %257 = arith.divf %255, %256 : vector<4x16xf32>
    %258 = vector.extract_strided_slice %213 {offsets = [0, 32], sizes = [4, 16], strides = [1, 1]} : vector<4x48xf32> to vector<4x16xf32>
    %259 = vector.extract_strided_slice %241 {offsets = [0, 32], sizes = [4, 16], strides = [1, 1]} : vector<4x48xf32> to vector<4x16xf32>
    %260 = vector.broadcast %41 : vector<1x16xf32> to vector<4x16xf32>
    %261 = arith.addf %259, %260 : vector<4x16xf32>
    %262 = arith.mulf %249, %261 : vector<4x16xf32>
    %263 = arith.addf %258, %262 : vector<4x16xf32>
    %264 = math.tanh %263 : vector<4x16xf32>
    %265 = arith.subf %211, %264 : vector<4x16xf32>
    %266 = arith.mulf %257, %265 : vector<4x16xf32>
    %267 = arith.addf %264, %266 : vector<4x16xf32>
    %268 = vector.extract_strided_slice %37 {offsets = [16, 0], sizes = [4, 48], strides = [1, 1]} : vector<32x96xf32> to vector<4x48xf32>
    %269 = vector.extract_strided_slice %37 {offsets = [12, 48], sizes = [4, 48], strides = [1, 1]} : vector<32x96xf32> to vector<4x48xf32>
    %cst_54 = arith.constant dense<0.000000e+00> : vector<4x48xf32>
    %270 = tpu.matmul %240, %38, %cst_54 {dimension_numbers = #tpu.dot_dimension_numbers<[1], [0], [0], [1], [0, 0, 1, 1], [], []>} : vector<4x16xf32>, vector<16x48xf32>, vector<4x48xf32> -> vector<4x48xf32>
    %271 = vector.extract_strided_slice %268 {offsets = [0, 0], sizes = [4, 16], strides = [1, 1]} : vector<4x48xf32> to vector<4x16xf32>
    %272 = vector.extract_strided_slice %270 {offsets = [0, 0], sizes = [4, 16], strides = [1, 1]} : vector<4x48xf32> to vector<4x16xf32>
    %273 = arith.addf %271, %272 : vector<4x16xf32>
    %274 = arith.negf %273 : vector<4x16xf32>
    %275 = math.exp %274 : vector<4x16xf32>
    %cst_55 = arith.constant 1.000000e+00 : f32
    %276 = vector.broadcast %cst_55 : f32 to vector<4x16xf32>
    %277 = arith.addf %276, %275 : vector<4x16xf32>
    %278 = arith.divf %276, %277 : vector<4x16xf32>
    %279 = vector.extract_strided_slice %268 {offsets = [0, 16], sizes = [4, 16], strides = [1, 1]} : vector<4x48xf32> to vector<4x16xf32>
    %280 = vector.extract_strided_slice %270 {offsets = [0, 16], sizes = [4, 16], strides = [1, 1]} : vector<4x48xf32> to vector<4x16xf32>
    %281 = arith.addf %279, %280 : vector<4x16xf32>
    %282 = arith.negf %281 : vector<4x16xf32>
    %283 = math.exp %282 : vector<4x16xf32>
    %cst_56 = arith.constant 1.000000e+00 : f32
    %284 = vector.broadcast %cst_56 : f32 to vector<4x16xf32>
    %285 = arith.addf %284, %283 : vector<4x16xf32>
    %286 = arith.divf %284, %285 : vector<4x16xf32>
    %287 = vector.extract_strided_slice %268 {offsets = [0, 32], sizes = [4, 16], strides = [1, 1]} : vector<4x48xf32> to vector<4x16xf32>
    %288 = vector.extract_strided_slice %270 {offsets = [0, 32], sizes = [4, 16], strides = [1, 1]} : vector<4x48xf32> to vector<4x16xf32>
    %289 = vector.broadcast %40 : vector<1x16xf32> to vector<4x16xf32>
    %290 = arith.addf %288, %289 : vector<4x16xf32>
    %291 = arith.mulf %278, %290 : vector<4x16xf32>
    %292 = arith.addf %287, %291 : vector<4x16xf32>
    %293 = math.tanh %292 : vector<4x16xf32>
    %294 = arith.subf %240, %293 : vector<4x16xf32>
    %295 = arith.mulf %286, %294 : vector<4x16xf32>
    %296 = arith.addf %293, %295 : vector<4x16xf32>
    %cst_57 = arith.constant dense<0.000000e+00> : vector<4x48xf32>
    %297 = tpu.matmul %267, %39, %cst_57 {dimension_numbers = #tpu.dot_dimension_numbers<[1], [0], [0], [1], [0, 0, 1, 1], [], []>} : vector<4x16xf32>, vector<16x48xf32>, vector<4x48xf32> -> vector<4x48xf32>
    %298 = vector.extract_strided_slice %269 {offsets = [0, 0], sizes = [4, 16], strides = [1, 1]} : vector<4x48xf32> to vector<4x16xf32>
    %299 = vector.extract_strided_slice %297 {offsets = [0, 0], sizes = [4, 16], strides = [1, 1]} : vector<4x48xf32> to vector<4x16xf32>
    %300 = arith.addf %298, %299 : vector<4x16xf32>
    %301 = arith.negf %300 : vector<4x16xf32>
    %302 = math.exp %301 : vector<4x16xf32>
    %cst_58 = arith.constant 1.000000e+00 : f32
    %303 = vector.broadcast %cst_58 : f32 to vector<4x16xf32>
    %304 = arith.addf %303, %302 : vector<4x16xf32>
    %305 = arith.divf %303, %304 : vector<4x16xf32>
    %306 = vector.extract_strided_slice %269 {offsets = [0, 16], sizes = [4, 16], strides = [1, 1]} : vector<4x48xf32> to vector<4x16xf32>
    %307 = vector.extract_strided_slice %297 {offsets = [0, 16], sizes = [4, 16], strides = [1, 1]} : vector<4x48xf32> to vector<4x16xf32>
    %308 = arith.addf %306, %307 : vector<4x16xf32>
    %309 = arith.negf %308 : vector<4x16xf32>
    %310 = math.exp %309 : vector<4x16xf32>
    %cst_59 = arith.constant 1.000000e+00 : f32
    %311 = vector.broadcast %cst_59 : f32 to vector<4x16xf32>
    %312 = arith.addf %311, %310 : vector<4x16xf32>
    %313 = arith.divf %311, %312 : vector<4x16xf32>
    %314 = vector.extract_strided_slice %269 {offsets = [0, 32], sizes = [4, 16], strides = [1, 1]} : vector<4x48xf32> to vector<4x16xf32>
    %315 = vector.extract_strided_slice %297 {offsets = [0, 32], sizes = [4, 16], strides = [1, 1]} : vector<4x48xf32> to vector<4x16xf32>
    %316 = vector.broadcast %41 : vector<1x16xf32> to vector<4x16xf32>
    %317 = arith.addf %315, %316 : vector<4x16xf32>
    %318 = arith.mulf %305, %317 : vector<4x16xf32>
    %319 = arith.addf %314, %318 : vector<4x16xf32>
    %320 = math.tanh %319 : vector<4x16xf32>
    %321 = arith.subf %267, %320 : vector<4x16xf32>
    %322 = arith.mulf %313, %321 : vector<4x16xf32>
    %323 = arith.addf %320, %322 : vector<4x16xf32>
    %324 = vector.extract_strided_slice %37 {offsets = [20, 0], sizes = [4, 48], strides = [1, 1]} : vector<32x96xf32> to vector<4x48xf32>
    %325 = vector.extract_strided_slice %37 {offsets = [8, 48], sizes = [4, 48], strides = [1, 1]} : vector<32x96xf32> to vector<4x48xf32>
    %cst_60 = arith.constant dense<0.000000e+00> : vector<4x48xf32>
    %326 = tpu.matmul %296, %38, %cst_60 {dimension_numbers = #tpu.dot_dimension_numbers<[1], [0], [0], [1], [0, 0, 1, 1], [], []>} : vector<4x16xf32>, vector<16x48xf32>, vector<4x48xf32> -> vector<4x48xf32>
    %327 = vector.extract_strided_slice %324 {offsets = [0, 0], sizes = [4, 16], strides = [1, 1]} : vector<4x48xf32> to vector<4x16xf32>
    %328 = vector.extract_strided_slice %326 {offsets = [0, 0], sizes = [4, 16], strides = [1, 1]} : vector<4x48xf32> to vector<4x16xf32>
    %329 = arith.addf %327, %328 : vector<4x16xf32>
    %330 = arith.negf %329 : vector<4x16xf32>
    %331 = math.exp %330 : vector<4x16xf32>
    %cst_61 = arith.constant 1.000000e+00 : f32
    %332 = vector.broadcast %cst_61 : f32 to vector<4x16xf32>
    %333 = arith.addf %332, %331 : vector<4x16xf32>
    %334 = arith.divf %332, %333 : vector<4x16xf32>
    %335 = vector.extract_strided_slice %324 {offsets = [0, 16], sizes = [4, 16], strides = [1, 1]} : vector<4x48xf32> to vector<4x16xf32>
    %336 = vector.extract_strided_slice %326 {offsets = [0, 16], sizes = [4, 16], strides = [1, 1]} : vector<4x48xf32> to vector<4x16xf32>
    %337 = arith.addf %335, %336 : vector<4x16xf32>
    %338 = arith.negf %337 : vector<4x16xf32>
    %339 = math.exp %338 : vector<4x16xf32>
    %cst_62 = arith.constant 1.000000e+00 : f32
    %340 = vector.broadcast %cst_62 : f32 to vector<4x16xf32>
    %341 = arith.addf %340, %339 : vector<4x16xf32>
    %342 = arith.divf %340, %341 : vector<4x16xf32>
    %343 = vector.extract_strided_slice %324 {offsets = [0, 32], sizes = [4, 16], strides = [1, 1]} : vector<4x48xf32> to vector<4x16xf32>
    %344 = vector.extract_strided_slice %326 {offsets = [0, 32], sizes = [4, 16], strides = [1, 1]} : vector<4x48xf32> to vector<4x16xf32>
    %345 = vector.broadcast %40 : vector<1x16xf32> to vector<4x16xf32>
    %346 = arith.addf %344, %345 : vector<4x16xf32>
    %347 = arith.mulf %334, %346 : vector<4x16xf32>
    %348 = arith.addf %343, %347 : vector<4x16xf32>
    %349 = math.tanh %348 : vector<4x16xf32>
    %350 = arith.subf %296, %349 : vector<4x16xf32>
    %351 = arith.mulf %342, %350 : vector<4x16xf32>
    %352 = arith.addf %349, %351 : vector<4x16xf32>
    %cst_63 = arith.constant dense<0.000000e+00> : vector<4x48xf32>
    %353 = tpu.matmul %323, %39, %cst_63 {dimension_numbers = #tpu.dot_dimension_numbers<[1], [0], [0], [1], [0, 0, 1, 1], [], []>} : vector<4x16xf32>, vector<16x48xf32>, vector<4x48xf32> -> vector<4x48xf32>
    %354 = vector.extract_strided_slice %325 {offsets = [0, 0], sizes = [4, 16], strides = [1, 1]} : vector<4x48xf32> to vector<4x16xf32>
    %355 = vector.extract_strided_slice %353 {offsets = [0, 0], sizes = [4, 16], strides = [1, 1]} : vector<4x48xf32> to vector<4x16xf32>
    %356 = arith.addf %354, %355 : vector<4x16xf32>
    %357 = arith.negf %356 : vector<4x16xf32>
    %358 = math.exp %357 : vector<4x16xf32>
    %cst_64 = arith.constant 1.000000e+00 : f32
    %359 = vector.broadcast %cst_64 : f32 to vector<4x16xf32>
    %360 = arith.addf %359, %358 : vector<4x16xf32>
    %361 = arith.divf %359, %360 : vector<4x16xf32>
    %362 = vector.extract_strided_slice %325 {offsets = [0, 16], sizes = [4, 16], strides = [1, 1]} : vector<4x48xf32> to vector<4x16xf32>
    %363 = vector.extract_strided_slice %353 {offsets = [0, 16], sizes = [4, 16], strides = [1, 1]} : vector<4x48xf32> to vector<4x16xf32>
    %364 = arith.addf %362, %363 : vector<4x16xf32>
    %365 = arith.negf %364 : vector<4x16xf32>
    %366 = math.exp %365 : vector<4x16xf32>
    %cst_65 = arith.constant 1.000000e+00 : f32
    %367 = vector.broadcast %cst_65 : f32 to vector<4x16xf32>
    %368 = arith.addf %367, %366 : vector<4x16xf32>
    %369 = arith.divf %367, %368 : vector<4x16xf32>
    %370 = vector.extract_strided_slice %325 {offsets = [0, 32], sizes = [4, 16], strides = [1, 1]} : vector<4x48xf32> to vector<4x16xf32>
    %371 = vector.extract_strided_slice %353 {offsets = [0, 32], sizes = [4, 16], strides = [1, 1]} : vector<4x48xf32> to vector<4x16xf32>
    %372 = vector.broadcast %41 : vector<1x16xf32> to vector<4x16xf32>
    %373 = arith.addf %371, %372 : vector<4x16xf32>
    %374 = arith.mulf %361, %373 : vector<4x16xf32>
    %375 = arith.addf %370, %374 : vector<4x16xf32>
    %376 = math.tanh %375 : vector<4x16xf32>
    %377 = arith.subf %323, %376 : vector<4x16xf32>
    %378 = arith.mulf %369, %377 : vector<4x16xf32>
    %379 = arith.addf %376, %378 : vector<4x16xf32>
    %380 = vector.extract_strided_slice %37 {offsets = [24, 0], sizes = [4, 48], strides = [1, 1]} : vector<32x96xf32> to vector<4x48xf32>
    %381 = vector.extract_strided_slice %37 {offsets = [4, 48], sizes = [4, 48], strides = [1, 1]} : vector<32x96xf32> to vector<4x48xf32>
    %cst_66 = arith.constant dense<0.000000e+00> : vector<4x48xf32>
    %382 = tpu.matmul %352, %38, %cst_66 {dimension_numbers = #tpu.dot_dimension_numbers<[1], [0], [0], [1], [0, 0, 1, 1], [], []>} : vector<4x16xf32>, vector<16x48xf32>, vector<4x48xf32> -> vector<4x48xf32>
    %383 = vector.extract_strided_slice %380 {offsets = [0, 0], sizes = [4, 16], strides = [1, 1]} : vector<4x48xf32> to vector<4x16xf32>
    %384 = vector.extract_strided_slice %382 {offsets = [0, 0], sizes = [4, 16], strides = [1, 1]} : vector<4x48xf32> to vector<4x16xf32>
    %385 = arith.addf %383, %384 : vector<4x16xf32>
    %386 = arith.negf %385 : vector<4x16xf32>
    %387 = math.exp %386 : vector<4x16xf32>
    %cst_67 = arith.constant 1.000000e+00 : f32
    %388 = vector.broadcast %cst_67 : f32 to vector<4x16xf32>
    %389 = arith.addf %388, %387 : vector<4x16xf32>
    %390 = arith.divf %388, %389 : vector<4x16xf32>
    %391 = vector.extract_strided_slice %380 {offsets = [0, 16], sizes = [4, 16], strides = [1, 1]} : vector<4x48xf32> to vector<4x16xf32>
    %392 = vector.extract_strided_slice %382 {offsets = [0, 16], sizes = [4, 16], strides = [1, 1]} : vector<4x48xf32> to vector<4x16xf32>
    %393 = arith.addf %391, %392 : vector<4x16xf32>
    %394 = arith.negf %393 : vector<4x16xf32>
    %395 = math.exp %394 : vector<4x16xf32>
    %cst_68 = arith.constant 1.000000e+00 : f32
    %396 = vector.broadcast %cst_68 : f32 to vector<4x16xf32>
    %397 = arith.addf %396, %395 : vector<4x16xf32>
    %398 = arith.divf %396, %397 : vector<4x16xf32>
    %399 = vector.extract_strided_slice %380 {offsets = [0, 32], sizes = [4, 16], strides = [1, 1]} : vector<4x48xf32> to vector<4x16xf32>
    %400 = vector.extract_strided_slice %382 {offsets = [0, 32], sizes = [4, 16], strides = [1, 1]} : vector<4x48xf32> to vector<4x16xf32>
    %401 = vector.broadcast %40 : vector<1x16xf32> to vector<4x16xf32>
    %402 = arith.addf %400, %401 : vector<4x16xf32>
    %403 = arith.mulf %390, %402 : vector<4x16xf32>
    %404 = arith.addf %399, %403 : vector<4x16xf32>
    %405 = math.tanh %404 : vector<4x16xf32>
    %406 = arith.subf %352, %405 : vector<4x16xf32>
    %407 = arith.mulf %398, %406 : vector<4x16xf32>
    %408 = arith.addf %405, %407 : vector<4x16xf32>
    %cst_69 = arith.constant dense<0.000000e+00> : vector<4x48xf32>
    %409 = tpu.matmul %379, %39, %cst_69 {dimension_numbers = #tpu.dot_dimension_numbers<[1], [0], [0], [1], [0, 0, 1, 1], [], []>} : vector<4x16xf32>, vector<16x48xf32>, vector<4x48xf32> -> vector<4x48xf32>
    %410 = vector.extract_strided_slice %381 {offsets = [0, 0], sizes = [4, 16], strides = [1, 1]} : vector<4x48xf32> to vector<4x16xf32>
    %411 = vector.extract_strided_slice %409 {offsets = [0, 0], sizes = [4, 16], strides = [1, 1]} : vector<4x48xf32> to vector<4x16xf32>
    %412 = arith.addf %410, %411 : vector<4x16xf32>
    %413 = arith.negf %412 : vector<4x16xf32>
    %414 = math.exp %413 : vector<4x16xf32>
    %cst_70 = arith.constant 1.000000e+00 : f32
    %415 = vector.broadcast %cst_70 : f32 to vector<4x16xf32>
    %416 = arith.addf %415, %414 : vector<4x16xf32>
    %417 = arith.divf %415, %416 : vector<4x16xf32>
    %418 = vector.extract_strided_slice %381 {offsets = [0, 16], sizes = [4, 16], strides = [1, 1]} : vector<4x48xf32> to vector<4x16xf32>
    %419 = vector.extract_strided_slice %409 {offsets = [0, 16], sizes = [4, 16], strides = [1, 1]} : vector<4x48xf32> to vector<4x16xf32>
    %420 = arith.addf %418, %419 : vector<4x16xf32>
    %421 = arith.negf %420 : vector<4x16xf32>
    %422 = math.exp %421 : vector<4x16xf32>
    %cst_71 = arith.constant 1.000000e+00 : f32
    %423 = vector.broadcast %cst_71 : f32 to vector<4x16xf32>
    %424 = arith.addf %423, %422 : vector<4x16xf32>
    %425 = arith.divf %423, %424 : vector<4x16xf32>
    %426 = vector.extract_strided_slice %381 {offsets = [0, 32], sizes = [4, 16], strides = [1, 1]} : vector<4x48xf32> to vector<4x16xf32>
    %427 = vector.extract_strided_slice %409 {offsets = [0, 32], sizes = [4, 16], strides = [1, 1]} : vector<4x48xf32> to vector<4x16xf32>
    %428 = vector.broadcast %41 : vector<1x16xf32> to vector<4x16xf32>
    %429 = arith.addf %427, %428 : vector<4x16xf32>
    %430 = arith.mulf %417, %429 : vector<4x16xf32>
    %431 = arith.addf %426, %430 : vector<4x16xf32>
    %432 = math.tanh %431 : vector<4x16xf32>
    %433 = arith.subf %379, %432 : vector<4x16xf32>
    %434 = arith.mulf %425, %433 : vector<4x16xf32>
    %435 = arith.addf %432, %434 : vector<4x16xf32>
    %436 = vector.extract_strided_slice %37 {offsets = [28, 0], sizes = [4, 48], strides = [1, 1]} : vector<32x96xf32> to vector<4x48xf32>
    %437 = vector.extract_strided_slice %37 {offsets = [0, 48], sizes = [4, 48], strides = [1, 1]} : vector<32x96xf32> to vector<4x48xf32>
    %cst_72 = arith.constant dense<0.000000e+00> : vector<4x48xf32>
    %438 = tpu.matmul %408, %38, %cst_72 {dimension_numbers = #tpu.dot_dimension_numbers<[1], [0], [0], [1], [0, 0, 1, 1], [], []>} : vector<4x16xf32>, vector<16x48xf32>, vector<4x48xf32> -> vector<4x48xf32>
    %439 = vector.extract_strided_slice %436 {offsets = [0, 0], sizes = [4, 16], strides = [1, 1]} : vector<4x48xf32> to vector<4x16xf32>
    %440 = vector.extract_strided_slice %438 {offsets = [0, 0], sizes = [4, 16], strides = [1, 1]} : vector<4x48xf32> to vector<4x16xf32>
    %441 = arith.addf %439, %440 : vector<4x16xf32>
    %442 = arith.negf %441 : vector<4x16xf32>
    %443 = math.exp %442 : vector<4x16xf32>
    %cst_73 = arith.constant 1.000000e+00 : f32
    %444 = vector.broadcast %cst_73 : f32 to vector<4x16xf32>
    %445 = arith.addf %444, %443 : vector<4x16xf32>
    %446 = arith.divf %444, %445 : vector<4x16xf32>
    %447 = vector.extract_strided_slice %436 {offsets = [0, 16], sizes = [4, 16], strides = [1, 1]} : vector<4x48xf32> to vector<4x16xf32>
    %448 = vector.extract_strided_slice %438 {offsets = [0, 16], sizes = [4, 16], strides = [1, 1]} : vector<4x48xf32> to vector<4x16xf32>
    %449 = arith.addf %447, %448 : vector<4x16xf32>
    %450 = arith.negf %449 : vector<4x16xf32>
    %451 = math.exp %450 : vector<4x16xf32>
    %cst_74 = arith.constant 1.000000e+00 : f32
    %452 = vector.broadcast %cst_74 : f32 to vector<4x16xf32>
    %453 = arith.addf %452, %451 : vector<4x16xf32>
    %454 = arith.divf %452, %453 : vector<4x16xf32>
    %455 = vector.extract_strided_slice %436 {offsets = [0, 32], sizes = [4, 16], strides = [1, 1]} : vector<4x48xf32> to vector<4x16xf32>
    %456 = vector.extract_strided_slice %438 {offsets = [0, 32], sizes = [4, 16], strides = [1, 1]} : vector<4x48xf32> to vector<4x16xf32>
    %457 = vector.broadcast %40 : vector<1x16xf32> to vector<4x16xf32>
    %458 = arith.addf %456, %457 : vector<4x16xf32>
    %459 = arith.mulf %446, %458 : vector<4x16xf32>
    %460 = arith.addf %455, %459 : vector<4x16xf32>
    %461 = math.tanh %460 : vector<4x16xf32>
    %462 = arith.subf %408, %461 : vector<4x16xf32>
    %463 = arith.mulf %454, %462 : vector<4x16xf32>
    %464 = arith.addf %461, %463 : vector<4x16xf32>
    %cst_75 = arith.constant dense<0.000000e+00> : vector<4x48xf32>
    %465 = tpu.matmul %435, %39, %cst_75 {dimension_numbers = #tpu.dot_dimension_numbers<[1], [0], [0], [1], [0, 0, 1, 1], [], []>} : vector<4x16xf32>, vector<16x48xf32>, vector<4x48xf32> -> vector<4x48xf32>
    %466 = vector.extract_strided_slice %437 {offsets = [0, 0], sizes = [4, 16], strides = [1, 1]} : vector<4x48xf32> to vector<4x16xf32>
    %467 = vector.extract_strided_slice %465 {offsets = [0, 0], sizes = [4, 16], strides = [1, 1]} : vector<4x48xf32> to vector<4x16xf32>
    %468 = arith.addf %466, %467 : vector<4x16xf32>
    %469 = arith.negf %468 : vector<4x16xf32>
    %470 = math.exp %469 : vector<4x16xf32>
    %cst_76 = arith.constant 1.000000e+00 : f32
    %471 = vector.broadcast %cst_76 : f32 to vector<4x16xf32>
    %472 = arith.addf %471, %470 : vector<4x16xf32>
    %473 = arith.divf %471, %472 : vector<4x16xf32>
    %474 = vector.extract_strided_slice %437 {offsets = [0, 16], sizes = [4, 16], strides = [1, 1]} : vector<4x48xf32> to vector<4x16xf32>
    %475 = vector.extract_strided_slice %465 {offsets = [0, 16], sizes = [4, 16], strides = [1, 1]} : vector<4x48xf32> to vector<4x16xf32>
    %476 = arith.addf %474, %475 : vector<4x16xf32>
    %477 = arith.negf %476 : vector<4x16xf32>
    %478 = math.exp %477 : vector<4x16xf32>
    %cst_77 = arith.constant 1.000000e+00 : f32
    %479 = vector.broadcast %cst_77 : f32 to vector<4x16xf32>
    %480 = arith.addf %479, %478 : vector<4x16xf32>
    %481 = arith.divf %479, %480 : vector<4x16xf32>
    %482 = vector.extract_strided_slice %437 {offsets = [0, 32], sizes = [4, 16], strides = [1, 1]} : vector<4x48xf32> to vector<4x16xf32>
    %483 = vector.extract_strided_slice %465 {offsets = [0, 32], sizes = [4, 16], strides = [1, 1]} : vector<4x48xf32> to vector<4x16xf32>
    %484 = vector.broadcast %41 : vector<1x16xf32> to vector<4x16xf32>
    %485 = arith.addf %483, %484 : vector<4x16xf32>
    %486 = arith.mulf %473, %485 : vector<4x16xf32>
    %487 = arith.addf %482, %486 : vector<4x16xf32>
    %488 = math.tanh %487 : vector<4x16xf32>
    %489 = arith.subf %435, %488 : vector<4x16xf32>
    %490 = arith.mulf %481, %489 : vector<4x16xf32>
    %491 = arith.addf %488, %490 : vector<4x16xf32>
    %492 = tpu.concatenate %72, %491 in 1 : vector<4x16xf32>, vector<4x16xf32> -> vector<4x32xf32>
    %493 = tpu.concatenate %128, %435 in 1 : vector<4x16xf32>, vector<4x16xf32> -> vector<4x32xf32>
    %494 = tpu.concatenate %184, %379 in 1 : vector<4x16xf32>, vector<4x16xf32> -> vector<4x32xf32>
    %495 = tpu.concatenate %240, %323 in 1 : vector<4x16xf32>, vector<4x16xf32> -> vector<4x32xf32>
    %496 = tpu.concatenate %296, %267 in 1 : vector<4x16xf32>, vector<4x16xf32> -> vector<4x32xf32>
    %497 = tpu.concatenate %352, %211 in 1 : vector<4x16xf32>, vector<4x16xf32> -> vector<4x32xf32>
    %498 = tpu.concatenate %408, %155 in 1 : vector<4x16xf32>, vector<4x16xf32> -> vector<4x32xf32>
    %499 = tpu.concatenate %464, %99 in 1 : vector<4x16xf32>, vector<4x16xf32> -> vector<4x32xf32>
    %500 = tpu.concatenate %492, %493, %494, %495, %496, %497, %498, %499 in 0 : vector<4x32xf32>, vector<4x32xf32>, vector<4x32xf32>, vector<4x32xf32>, vector<4x32xf32>, vector<4x32xf32>, vector<4x32xf32>, vector<4x32xf32> -> vector<32x32xf32>
    %cst_78 = arith.constant 0.000000e+00 : f32
    %501 = vector.broadcast %cst_78 : f32 to vector<32x32xf32>
    %502 = arith.maximumf %500, %501 : vector<32x32xf32>
    %c0_79 = arith.constant 0 : index
    %c0_80 = arith.constant 0 : index
    %503 = vector.load %arg11[%c0_79, %c0_80] : memref<32x32xf32, #tpu.memory_space<vmem>>, vector<32x32xf32>
    tpu.vector_store %arg11[%c0_79, %c0_80], %502 {strides = array<i32>} : memref<32x32xf32, #tpu.memory_space<vmem>>, vector<32x32xf32>,
    return
  }
}

</mosaic_0001>

<llo_original>
// kernel: coordnet_forward.1
$region0: #{coordnet_forward.1}
  #allocation0 [shape = 'u32[]', space=smem, size = 0x4, offset = 0x4, fixed_abs, tag = 'smem constant byte address 0x4 - core index']
  #allocation1 [shape = 'u32[144,128]{1,0:T(1,128)}', space=vmem, size = 0x12000, scoped, tag = 'internal scratch']
  %s0 = inlined_call_operand.vmem [shape: bf16[32,32], index: 0, kind: input, shape index: {}]
  %s1 = inlined_call_operand.vmem [shape: bf16[32,16], index: 1, kind: input, shape index: {}]
  %s2 = inlined_call_operand.vmem [shape: f32[1,16], index: 2, kind: input, shape index: {}]
  %s3 = inlined_call_operand.vmem [shape: f32[1,16], index: 3, kind: input, shape index: {}]
  %s4 = inlined_call_operand.vmem [shape: f32[1,16], index: 4, kind: input, shape index: {}]
  %s5 = inlined_call_operand.vmem [shape: bf16[16,96], index: 5, kind: input, shape index: {}]
  %s6 = inlined_call_operand.vmem [shape: f32[1,96], index: 6, kind: input, shape index: {}]
  %s7 = inlined_call_operand.vmem [shape: f32[16,48], index: 7, kind: input, shape index: {}]
  %s8 = inlined_call_operand.vmem [shape: f32[16,48], index: 8, kind: input, shape index: {}]
  %s9 = inlined_call_operand.vmem [shape: f32[1,16], index: 9, kind: input, shape index: {}]
  %s10 = inlined_call_operand.vmem [shape: f32[1,16], index: 10, kind: input, shape index: {}]
  %s11 = inlined_call_operand.vmem [shape: f32[32,32], index: 11, kind: output, shape index: {}]
  %s12 = sld [smem:[#allocation0]]
  $region54: #{coordnet_forward.1} parent=0
    _
  %s14 = ssub.s32 1, %s12
  %s15 = scalar_select 0, %s14, %s12
  // Predicated region
  $region2: #{coordnet_forward.1} parent=0 // pred_check
    _
  $region3: #{coordnet_forward.1} parent=0 // pred_check_branch
    %17 = sbr.rel (0) target = $region5
  $region4: #{coordnet_forward.1} parent=0 // pred_region
    _
  $region5: #{coordnet_forward.1} parent=0 // pred_fallthru
    _
  // Predicated region
  $region6: #{coordnet_forward.1} parent=0 // pred_check
    _
  $region7: #{coordnet_forward.1} parent=0 // pred_check_branch
    %19 = sbr.rel (0) target = $region9
  $region8: #{coordnet_forward.1} parent=0 // pred_region
    _
  $region9: #{coordnet_forward.1} parent=0 // pred_fallthru
    _
  // Predicated region
  $region10: #{coordnet_forward.1} parent=0 // pred_check
    _
  $region11: #{coordnet_forward.1} parent=0 // pred_check_branch
    %21 = sbr.rel (0) target = $region13
  $region12: #{coordnet_forward.1} parent=0 // pred_region
    _
  $region13: #{coordnet_forward.1} parent=0 // pred_fallthru
    _
  // Predicated region
  $region14: #{coordnet_forward.1} parent=0 // pred_check
    _
  $region15: #{coordnet_forward.1} parent=0 // pred_check_branch
    %23 = sbr.rel (0) target = $region17
  $region16: #{coordnet_forward.1} parent=0 // pred_region
    _
  $region17: #{coordnet_forward.1} parent=0 // pred_fallthru
    _
  // Predicated region
  $region18: #{coordnet_forward.1} parent=0 // pred_check
    _
  $region19: #{coordnet_forward.1} parent=0 // pred_check_branch
    %25 = sbr.rel (0) target = $region21
  $region20: #{coordnet_forward.1} parent=0 // pred_region
    _
  $region21: #{coordnet_forward.1} parent=0 // pred_fallthru
    _
  // Predicated region
  $region22: #{coordnet_forward.1} parent=0 // pred_check
    _
  $region23: #{coordnet_forward.1} parent=0 // pred_check_branch
    %27 = sbr.rel (0) target = $region25
  $region24: #{coordnet_forward.1} parent=0 // pred_region
    _
  $region25: #{coordnet_forward.1} parent=0 // pred_fallthru
    _
  // Predicated region
  $region26: #{coordnet_forward.1} parent=0 // pred_check
    _
  $region27: #{coordnet_forward.1} parent=0 // pred_check_branch
    %29 = sbr.rel (0) target = $region29
  $region28: #{coordnet_forward.1} parent=0 // pred_region
    _
  $region29: #{coordnet_forward.1} parent=0 // pred_fallthru
    _
  // Predicated region
  $region30: #{coordnet_forward.1} parent=0 // pred_check
    _
  $region31: #{coordnet_forward.1} parent=0 // pred_check_branch
    %31 = sbr.rel (0) target = $region33
  $region32: #{coordnet_forward.1} parent=0 // pred_region
    _
  $region33: #{coordnet_forward.1} parent=0 // pred_fallthru
    _
  // Predicated region
  $region34: #{coordnet_forward.1} parent=0 // pred_check
    _
  $region35: #{coordnet_forward.1} parent=0 // pred_check_branch
    %33 = sbr.rel (0) target = $region37
  $region36: #{coordnet_forward.1} parent=0 // pred_region
    _
  $region37: #{coordnet_forward.1} parent=0 // pred_fallthru
    _
  // Predicated region
  $region38: #{coordnet_forward.1} parent=0 // pred_check
    _
  $region39: #{coordnet_forward.1} parent=0 // pred_check_branch
    %35 = sbr.rel (0) target = $region41
  $region40: #{coordnet_forward.1} parent=0 // pred_region
    _
  $region41: #{coordnet_forward.1} parent=0 // pred_fallthru
    _
  // Predicated region
  $region42: #{coordnet_forward.1} parent=0 // pred_check
    _
  $region43: #{coordnet_forward.1} parent=0 // pred_check_branch
    %37 = sbr.rel (0) target = $region45
  $region44: #{coordnet_forward.1} parent=0 // pred_region
    _
  $region45: #{coordnet_forward.1} parent=0 // pred_fallthru
    _
  %v39 = vld [vmem:[%s0] sm:$0xf]
  %v40 = vld [vmem:[%s0 + $0x4] sm:$0xf]
  %v41 = vld [vmem:[%s0 + $0x8] sm:$0xf]
  %v42 = vld [vmem:[%s0 + $0xc] sm:$0xf]
  %v43 = vld [vmem:[%s1] sm:$0xf]
  %v44 = vld [vmem:[%s1 + $0x4] sm:$0xf]
  %v45 = vld [vmem:[%s1 + $0x8] sm:$0xf]
  %v46 = vld [vmem:[%s1 + $0xc] sm:$0xf]
  %v47 = vld [vmem:[%s2] sm:$0x1]
  %v49 = vlaneseq
  %v50 = vshrl.u32 %v49, 7
  %v51 = vsub.s32 0, %v50
  %v52 = vrot.slane %v47, %v51
  %v58 = vunpack.c.l.b16 %v39
  %v59 = vunpack.c.l.b16 %v40
  %v60 = vunpack.c.l.b16 %v41
  %v61 = vunpack.c.l.b16 %v42
  %v62 = vpack.c.b16 %v59, %v58
  %v63 = vpack.c.b16 %v61, %v60
  %v68 = vunpack.c.l.b16 %v43
  %v69 = vunpack.c.l.b16 %v44
  %v70 = vunpack.c.l.b16 %v45
  %v71 = vunpack.c.l.b16 %v46
  %v72 = vpack.c.b16 %v69, %v68
  %v73 = vpack.c.b16 %v71, %v70
  %vm76 = vcmask 261120
  %v78 = vsel %vm76, %v62, 0
  %v81 = vsel %vm76, %v63, 0
  %83 = vmatprep.subr.bf16.mxu0 0
  %84 = vmatpush1.bf16.msra.mxu0 0
  %85 = vmatprep.subr.bf16.mxu0 0
  %86 = vmatpush1.bf16.msra.mxu0 0
  %87 = vmatprep.subr.bf16.mxu0 0
  %88 = vmatpush1.bf16.msra.mxu0 0
  %89 = vmatprep.subr.bf16.mxu0 0
  %90 = vmatpush1.bf16.msra.mxu0 0
  %91 = vmatprep.subr.bf16.mxu0 0
  %92 = vmatpush1.bf16.msra.mxu0 0
  %93 = vmatprep.subr.bf16.mxu0 0
  %94 = vmatpush1.bf16.msra.mxu0 0
  %95 = vmatprep.subr.bf16.mxu0 0
  %96 = vmatpush1.bf16.msra.mxu0 %v73
  %97 = vmatprep.subr.bf16.mxu0 0
  %98 = vmatpush1.bf16.msra.mxu0 %v72
  %99 = vmatprep.subr.bf16.mxu0 0
  %100 = vmatpush2.bf16.msra.mxu0 0
  %101 = vmatprep.subr.bf16.mxu0 0
  %102 = vmatpush2.bf16.msra.mxu0 0
  %103 = vmatprep.subr.bf16.mxu0 0
  %104 = vmatpush2.bf16.msra.mxu0 0
  %105 = vmatprep.subr.bf16.mxu0 0
  %106 = vmatpush2.bf16.msra.mxu0 0
  %107 = vmatprep.subr.bf16.mxu0 0
  %108 = vmatpush2.bf16.msra.mxu0 0
  %109 = vmatprep.subr.bf16.mxu0 0
  %110 = vmatpush2.bf16.msra.mxu0 0
  %111 = vmatprep.subr.bf16.mxu0 0
  %112 = vmatpush2.bf16.msra.mxu0 0
  %113 = vmatprep.subr.bf16.mxu0 0
  %114 = vmatpush2.bf16.msra.mxu0 0
  %115 = vmatprep.mubr.bf16.mxu0 0
  %116 = vmatmul.mubr.bf16.gmra.mxu0 %v78
  %v117 = vpop.f32.mrf.mxu0
  %v118 = vadd.f32 %v52, %v117
  %v119 = vpop.f32.mrf.mxu0
  %v120 = vpop.f32.mrf.mxu0
  %v121 = vadd.f32 %v52, %v120
  %v122 = vpop.f32.mrf.mxu0
  %123 = vmatprep.mubr.bf16.mxu0 0
  %124 = vmatmul.mubr.bf16.gmra.mxu0 %v81
  %v125 = vpop.f32.mrf.mxu0
  %v126 = vadd.f32 %v52, %v125
  %v127 = vpop.f32.mrf.mxu0
  %v128 = vpop.f32.mrf.mxu0
  %v129 = vadd.f32 %v52, %v128
  %v130 = vpop.f32.mrf.mxu0
  %131 = vdwg.mxu0
  %v132 = vmax.f32 %v118, 0.0
  %v133 = vmax.f32 %v121, 0.0
  %v134 = vmax.f32 %v126, 0.0
  %v135 = vmax.f32 %v129, 0.0
  %vm136 = vcmask 130048
  %v137 = vsel %vm136, %v132, 0.0
  %138 = vadd.xlane.f32.xlu0 %v137
  %v139 = vpop.xlane.xlu0 %138
  %v140 = vsel %vm136, %v133, 0.0
  %141 = vadd.xlane.f32.xlu0 %v140
  %v142 = vpop.xlane.xlu0 %141
  %v143 = vsel %vm136, %v134, 0.0
  %144 = vadd.xlane.f32.xlu0 %v143
  %v145 = vpop.xlane.xlu0 %144
  %v146 = vsel %vm136, %v135, 0.0
  %147 = vadd.xlane.f32.xlu0 %v146
  %v148 = vpop.xlane.xlu0 %147
  %v149 = vrcp.pop 16.0
  %v150 = vmul.f32 %v139, %v149
  %v151 = vmul.f32 %v142, %v149
  %v152 = vmul.f32 %v145, %v149
  %v153 = vmul.f32 %v148, %v149
  %v154 = vsub.f32 %v132, %v150
  %v155 = vsub.f32 %v133, %v151
  %v156 = vsub.f32 %v134, %v152
  %v157 = vsub.f32 %v135, %v153
  %v158 = vmul.f32 %v154, %v154
  %v159 = vmul.f32 %v155, %v155
  %v160 = vmul.f32 %v156, %v156
  %v161 = vmul.f32 %v157, %v157
  %v162 = vsel %vm136, %v158, 0.0
  %163 = vadd.xlane.f32.xlu0 %v162
  %v164 = vpop.xlane.xlu0 %163
  %v165 = vsel %vm136, %v159, 0.0
  %166 = vadd.xlane.f32.xlu0 %v165
  %v167 = vpop.xlane.xlu0 %166
  %v168 = vsel %vm136, %v160, 0.0
  %169 = vadd.xlane.f32.xlu0 %v168
  %v170 = vpop.xlane.xlu0 %169
  %v171 = vsel %vm136, %v161, 0.0
  %172 = vadd.xlane.f32.xlu0 %v171
  %v173 = vpop.xlane.xlu0 %172
  %v174 = vmul.f32 %v164, %v149
  %v175 = vmul.f32 %v167, %v149
  %v176 = vmul.f32 %v170, %v149
  %v177 = vmul.f32 %v173, %v149
  %v178 = vadd.f32 %v174, 1e-05
  %v179 = vadd.f32 %v175, 1e-05
  %v180 = vadd.f32 %v176, 1e-05
  %v181 = vadd.f32 %v177, 1e-05
  %v182 = vrsqrt.pop %v178
  %v183 = vrsqrt.pop %v179
  %v184 = vrsqrt.pop %v180
  %v185 = vrsqrt.pop %v181
  %v186 = vmul.f32 %v154, %v182
  %v187 = vmul.f32 %v155, %v183
  %v188 = vmul.f32 %v156, %v184
  %v189 = vmul.f32 %v157, %v185
  %v190 = vld [vmem:[%s3] sm:$0x1]
  %v192 = vlaneseq
  %v193 = vshrl.u32 %v192, 7
  %v194 = vsub.s32 0, %v193
  %v195 = vrot.slane %v190, %v194
  %v197 = vmul.f32 %v186, %v195
  %v198 = vmul.f32 %v187, %v195
  %v199 = vmul.f32 %v188, %v195
  %v200 = vmul.f32 %v189, %v195
  %v201 = vld [vmem:[%s4] sm:$0x1]
  %v203 = vlaneseq
  %v204 = vshrl.u32 %v203, 7
  %v205 = vsub.s32 0, %v204
  %v206 = vrot.slane %v201, %v205
  %v208 = vadd.f32 %v197, %v206
  %v209 = vadd.f32 %v198, %v206
  %v210 = vadd.f32 %v199, %v206
  %v211 = vadd.f32 %v200, %v206
  %v212 = vpack.c.bf16 %v209, %v208
  %v213 = vpack.c.bf16 %v211, %v210
  %v214 = vld [vmem:[%s5] sm:$0xf]
  %v215 = vld [vmem:[%s5 + $0x4] sm:$0xf]
  %v216 = vld [vmem:[%s6] sm:$0x1]
  %v218 = vlaneseq
  %v219 = vshrl.u32 %v218, 7
  %v220 = vsub.s32 0, %v219
  %v221 = vrot.slane %v216, %v220
  %v225 = vunpack.c.l.b16 %v214
  %v226 = vunpack.c.l.b16 %v215
  %v227 = vpack.c.b16 %v226, %v225
  %v230 = vsel %vm136, %v212, 0
  %v233 = vsel %vm136, %v213, 0
  %235 = vmatprep.subr.bf16.mxu0 0
  %236 = vmatpush1.bf16.msra.mxu0 0
  %237 = vmatprep.subr.bf16.mxu0 0
  %238 = vmatpush1.bf16.msra.mxu0 0
  %239 = vmatprep.subr.bf16.mxu0 0
  %240 = vmatpush1.bf16.msra.mxu0 0
  %241 = vmatprep.subr.bf16.mxu0 0
  %242 = vmatpush1.bf16.msra.mxu0 0
  %243 = vmatprep.subr.bf16.mxu0 0
  %244 = vmatpush1.bf16.msra.mxu0 0
  %245 = vmatprep.subr.bf16.mxu0 0
  %246 = vmatpush1.bf16.msra.mxu0 0
  %247 = vmatprep.subr.bf16.mxu0 0
  %248 = vmatpush1.bf16.msra.mxu0 0
  %249 = vmatprep.subr.bf16.mxu0 0
  %250 = vmatpush1.bf16.msra.mxu0 %v227
  %251 = vmatprep.subr.bf16.mxu0 0
  %252 = vmatpush2.bf16.msra.mxu0 0
  %253 = vmatprep.subr.bf16.mxu0 0
  %254 = vmatpush2.bf16.msra.mxu0 0
  %255 = vmatprep.subr.bf16.mxu0 0
  %256 = vmatpush2.bf16.msra.mxu0 0
  %257 = vmatprep.subr.bf16.mxu0 0
  %258 = vmatpush2.bf16.msra.mxu0 0
  %259 = vmatprep.subr.bf16.mxu0 0
  %260 = vmatpush2.bf16.msra.mxu0 0
  %261 = vmatprep.subr.bf16.mxu0 0
  %262 = vmatpush2.bf16.msra.mxu0 0
  %263 = vmatprep.subr.bf16.mxu0 0
  %264 = vmatpush2.bf16.msra.mxu0 0
  %265 = vmatprep.subr.bf16.mxu0 0
  %266 = vmatpush2.bf16.msra.mxu0 0
  %267 = vmatprep.mubr.bf16.mxu0 0
  %268 = vmatmul.mubr.bf16.gmra.mxu0 %v230
  %v269 = vpop.f32.mrf.mxu0
  %v270 = vadd.f32 %v221, %v269
  %v271 = vpop.f32.mrf.mxu0
  %v272 = vpop.f32.mrf.mxu0
  %v273 = vadd.f32 %v221, %v272
  %v274 = vpop.f32.mrf.mxu0
  %275 = vmatprep.mubr.bf16.mxu0 0
  %276 = vmatmul.mubr.bf16.gmra.mxu0 %v233
  %v277 = vpop.f32.mrf.mxu0
  %v278 = vadd.f32 %v221, %v277
  %v279 = vpop.f32.mrf.mxu0
  %v280 = vpop.f32.mrf.mxu0
  %v281 = vadd.f32 %v221, %v280
  %v282 = vpop.f32.mrf.mxu0
  %283 = vdwg.mxu0
  %v284 = vld [vmem:[%s7] sm:$0xff]
  %v285 = vld [vmem:[%s7 + $0x8] sm:$0xff]
  %v286 = vld [vmem:[%s8] sm:$0xff]
  %v287 = vld [vmem:[%s8 + $0x8] sm:$0xff]
  %v288 = vld [vmem:[%s9] sm:$0x1]
  %v289 = vld [vmem:[%s10] sm:$0x1]
  %v291 = vsel %vm136, 0.0, 0
  %293 = vmatprep.subr.mxu0 0.0
  %294 = vmatpush1.msra.mxu0 0.0
  %295 = vmatprep.subr.mxu0 0.0
  %296 = vmatpush1.msra.mxu0 0.0
  %297 = vmatprep.subr.mxu0 0.0
  %298 = vmatpush1.msra.mxu0 0.0
  %299 = vmatprep.subr.mxu0 0.0
  %300 = vmatpush1.msra.mxu0 0.0
  %301 = vmatprep.subr.mxu0 0.0
  %302 = vmatpush1.msra.mxu0 0.0
  %303 = vmatprep.subr.mxu0 0.0
  %304 = vmatpush1.msra.mxu0 0.0
  %305 = vmatprep.subr.mxu0 0.0
  %306 = vmatpush1.msra.mxu0 0.0
  %307 = vmatprep.subr.mxu0 0.0
  %308 = vmatpush1.msra.mxu0 0.0
  %309 = vmatprep.subr.mxu0 0.0
  %310 = vmatpush1.msra.mxu0 0.0
  %311 = vmatprep.subr.mxu0 0.0
  %312 = vmatpush1.msra.mxu0 0.0
  %313 = vmatprep.subr.mxu0 0.0
  %314 = vmatpush1.msra.mxu0 0.0
  %315 = vmatprep.subr.mxu0 0.0
  %316 = vmatpush1.msra.mxu0 0.0
  %317 = vmatprep.subr.mxu0 0.0
  %318 = vmatpush1.msra.mxu0 0.0
  %319 = vmatprep.subr.mxu0 0.0
  %320 = vmatpush1.msra.mxu0 0.0
  %321 = vmatprep.subr.mxu0 0.0
  %322 = vmatpush1.msra.mxu0 %v285
  %323 = vmatprep.subr.mxu0 0.0
  %324 = vmatpush1.msra.mxu0 %v284
  %325 = vmatprep.subr.mxu0 0.0
  %326 = vmatpush2.msra.mxu0 0.0
  %327 = vmatprep.subr.mxu0 0.0
  %328 = vmatpush2.msra.mxu0 0.0
  %329 = vmatprep.subr.mxu0 0.0
  %330 = vmatpush2.msra.mxu0 0.0
  %331 = vmatprep.subr.mxu0 0.0
  %332 = vmatpush2.msra.mxu0 0.0
  %333 = vmatprep.subr.mxu0 0.0
  %334 = vmatpush2.msra.mxu0 0.0
  %335 = vmatprep.subr.mxu0 0.0
  %336 = vmatpush2.msra.mxu0 0.0
  %337 = vmatprep.subr.mxu0 0.0
  %338 = vmatpush2.msra.mxu0 0.0
  %339 = vmatprep.subr.mxu0 0.0
  %340 = vmatpush2.msra.mxu0 0.0
  %341 = vmatprep.subr.mxu0 0.0
  %342 = vmatpush2.msra.mxu0 0.0
  %343 = vmatprep.subr.mxu0 0.0
  %344 = vmatpush2.msra.mxu0 0.0
  %345 = vmatprep.subr.mxu0 0.0
  %346 = vmatpush2.msra.mxu0 0.0
  %347 = vmatprep.subr.mxu0 0.0
  %348 = vmatpush2.msra.mxu0 0.0
  %349 = vmatprep.subr.mxu0 0.0
  %350 = vmatpush2.msra.mxu0 0.0
  %351 = vmatprep.subr.mxu0 0.0
  %352 = vmatpush2.msra.mxu0 0.0
  %353 = vmatprep.subr.mxu0 0.0
  %354 = vmatpush2.msra.mxu0 0.0
  %355 = vmatprep.subr.mxu0 0.0
  %356 = vmatpush2.msra.mxu0 0.0
  %357 = vmatprep.mubr.f32.mxu0 0.0
  %358 = vmatmul.mubr.f32.gmra.mxu0 %v291
  %v359 = vpop.f32.mrf.mxu0
  %v360 = vadd.f32 0.0, %v359
  %v361 = vpop.f32.mrf.mxu0
  %362 = vdwg.mxu0
  %v363 = vadd.f32 %v270, %v360
  %v364 = vxor.u32 %v363, 2147483648
  %v365 = vmul.f32 %v364, 1.442695
  %v366 = vpow.pop %v365
  %v367 = vadd.f32 %v366, 1.0
  %v368 = vrcp.pop %v367
  %v369 = vmul.f32 1.0, %v368
  %v371 = vlaneseq
  %v372 = vshrl.u32 %v371, 7
  %v373 = vsub.s32 0, %v372
  %v374 = vrot.slane %v288, %v373
  %375 = vrot.lane.b32.xlu0 %v374, 32
  %v376 = vpop.permute.xlu0 %375
  %v378 = vadd.f32 %v360, %v376
  %380 = vrot.lane.b32.xlu0 %v378, 96
  %v381 = vpop.permute.xlu0 %380
  %v383 = vmul.f32 %v369, %v381
  %385 = vrot.lane.b32.xlu0 %v383, 32
  %v386 = vpop.permute.xlu0 %385
  %v388 = vadd.f32 %v270, %v386
  %v389 = vtanh.pop %v388
  %v390 = vsub.f32 0.0, %v389
  %392 = vrot.lane.b32.xlu0 %v390, 112
  %v393 = vpop.permute.xlu0 %392
  %v395 = vmul.f32 %v369, %v393
  %397 = vrot.lane.b32.xlu0 %v395, 16
  %v398 = vpop.permute.xlu0 %397
  %v400 = vadd.f32 %v389, %v398
  %401 = vmatprep.subr.mxu0 0.0
  %402 = vmatpush1.msra.mxu0 0.0
  %403 = vmatprep.subr.mxu0 0.0
  %404 = vmatpush1.msra.mxu0 0.0
  %405 = vmatprep.subr.mxu0 0.0
  %406 = vmatpush1.msra.mxu0 0.0
  %407 = vmatprep.subr.mxu0 0.0
  %408 = vmatpush1.msra.mxu0 0.0
  %409 = vmatprep.subr.mxu0 0.0
  %410 = vmatpush1.msra.mxu0 0.0
  %411 = vmatprep.subr.mxu0 0.0
  %412 = vmatpush1.msra.mxu0 0.0
  %413 = vmatprep.subr.mxu0 0.0
  %414 = vmatpush1.msra.mxu0 0.0
  %415 = vmatprep.subr.mxu0 0.0
  %416 = vmatpush1.msra.mxu0 0.0
  %417 = vmatprep.subr.mxu0 0.0
  %418 = vmatpush1.msra.mxu0 0.0
  %419 = vmatprep.subr.mxu0 0.0
  %420 = vmatpush1.msra.mxu0 0.0
  %421 = vmatprep.subr.mxu0 0.0
  %422 = vmatpush1.msra.mxu0 0.0
  %423 = vmatprep.subr.mxu0 0.0
  %424 = vmatpush1.msra.mxu0 0.0
  %425 = vmatprep.subr.mxu0 0.0
  %426 = vmatpush1.msra.mxu0 0.0
  %427 = vmatprep.subr.mxu0 0.0
  %428 = vmatpush1.msra.mxu0 0.0
  %429 = vmatprep.subr.mxu0 0.0
  %430 = vmatpush1.msra.mxu0 %v287
  %431 = vmatprep.subr.mxu0 0.0
  %432 = vmatpush1.msra.mxu0 %v286
  %433 = vmatprep.subr.mxu0 0.0
  %434 = vmatpush2.msra.mxu0 0.0
  %435 = vmatprep.subr.mxu0 0.0
  %436 = vmatpush2.msra.mxu0 0.0
  %437 = vmatprep.subr.mxu0 0.0
  %438 = vmatpush2.msra.mxu0 0.0
  %439 = vmatprep.subr.mxu0 0.0
  %440 = vmatpush2.msra.mxu0 0.0
  %441 = vmatprep.subr.mxu0 0.0
  %442 = vmatpush2.msra.mxu0 0.0
  %443 = vmatprep.subr.mxu0 0.0
  %444 = vmatpush2.msra.mxu0 0.0
  %445 = vmatprep.subr.mxu0 0.0
  %446 = vmatpush2.msra.mxu0 0.0
  %447 = vmatprep.subr.mxu0 0.0
  %448 = vmatpush2.msra.mxu0 0.0
  %449 = vmatprep.subr.mxu0 0.0
  %450 = vmatpush2.msra.mxu0 0.0
  %451 = vmatprep.subr.mxu0 0.0
  %452 = vmatpush2.msra.mxu0 0.0
  %453 = vmatprep.subr.mxu0 0.0
  %454 = vmatpush2.msra.mxu0 0.0
  %455 = vmatprep.subr.mxu0 0.0
  %456 = vmatpush2.msra.mxu0 0.0
  %457 = vmatprep.subr.mxu0 0.0
  %458 = vmatpush2.msra.mxu0 0.0
  %459 = vmatprep.subr.mxu0 0.0
  %460 = vmatpush2.msra.mxu0 0.0
  %461 = vmatprep.subr.mxu0 0.0
  %462 = vmatpush2.msra.mxu0 0.0
  %463 = vmatprep.subr.mxu0 0.0
  %464 = vmatpush2.msra.mxu0 0.0
  %465 = vmatprep.mubr.f32.mxu0 0.0
  %466 = vmatmul.mubr.f32.gmra.mxu0 %v291
  %v467 = vpop.f32.mrf.mxu0
  %v468 = vadd.f32 0.0, %v467
  %v469 = vpop.f32.mrf.mxu0
  %470 = vdwg.mxu0
  %v472 = vrot.slane %v468, 4
  %473 = vrot.lane.b32.xlu0 %v472, 48
  %v474 = vpop.permute.xlu0 %473
  %v476 = vadd.f32 %v281, %v474
  %v477 = vxor.u32 %v476, 2147483648
  %v478 = vmul.f32 %v477, 1.442695
  %v479 = vpow.pop %v478
  %v480 = vadd.f32 %v479, 1.0
  %v481 = vrcp.pop %v480
  %v482 = vmul.f32 1.0, %v481
  %v484 = vlaneseq
  %v485 = vshrl.u32 %v484, 7
  %v486 = vsub.s32 0, %v485
  %v487 = vrot.slane %v289, %v486
  %488 = vrot.lane.b32.xlu0 %v487, 32
  %v489 = vpop.permute.xlu0 %488
  %v491 = vadd.f32 %v468, %v489
  %v493 = vrot.slane %v491, 4
  %494 = vrot.lane.b32.xlu0 %v493, 16
  %v495 = vpop.permute.xlu0 %494
  %v497 = vmul.f32 %v482, %v495
  %499 = vrot.lane.b32.xlu0 %v497, 32
  %v500 = vpop.permute.xlu0 %499
  %v502 = vadd.f32 %v281, %v500
  %v503 = vtanh.pop %v502
  %v504 = vsub.f32 0.0, %v503
  %506 = vrot.lane.b32.xlu0 %v504, 112
  %v507 = vpop.permute.xlu0 %506
  %v509 = vmul.f32 %v482, %v507
  %511 = vrot.lane.b32.xlu0 %v509, 16
  %v512 = vpop.permute.xlu0 %511
  %v514 = vadd.f32 %v503, %v512
  %516 = vrot.lane.b32.xlu0 %v400, 96
  %v517 = vpop.permute.xlu0 %516
  %v518 = vsel %vm136, %v517, 0
  %520 = vmatprep.subr.mxu0 0.0
  %521 = vmatpush1.msra.mxu0 0.0
  %522 = vmatprep.subr.mxu0 0.0
  %523 = vmatpush1.msra.mxu0 0.0
  %524 = vmatprep.subr.mxu0 0.0
  %525 = vmatpush1.msra.mxu0 0.0
  %526 = vmatprep.subr.mxu0 0.0
  %527 = vmatpush1.msra.mxu0 0.0
  %528 = vmatprep.subr.mxu0 0.0
  %529 = vmatpush1.msra.mxu0 0.0
  %530 = vmatprep.subr.mxu0 0.0
  %531 = vmatpush1.msra.mxu0 0.0
  %532 = vmatprep.subr.mxu0 0.0
  %533 = vmatpush1.msra.mxu0 0.0
  %534 = vmatprep.subr.mxu0 0.0
  %535 = vmatpush1.msra.mxu0 0.0
  %536 = vmatprep.subr.mxu0 0.0
  %537 = vmatpush1.msra.mxu0 0.0
  %538 = vmatprep.subr.mxu0 0.0
  %539 = vmatpush1.msra.mxu0 0.0
  %540 = vmatprep.subr.mxu0 0.0
  %541 = vmatpush1.msra.mxu0 0.0
  %542 = vmatprep.subr.mxu0 0.0
  %543 = vmatpush1.msra.mxu0 0.0
  %544 = vmatprep.subr.mxu0 0.0
  %545 = vmatpush1.msra.mxu0 0.0
  %546 = vmatprep.subr.mxu0 0.0
  %547 = vmatpush1.msra.mxu0 0.0
  %548 = vmatprep.subr.mxu0 0.0
  %549 = vmatpush1.msra.mxu0 %v285
  %550 = vmatprep.subr.mxu0 0.0
  %551 = vmatpush1.msra.mxu0 %v284
  %552 = vmatprep.subr.mxu0 0.0
  %553 = vmatpush2.msra.mxu0 0.0
  %554 = vmatprep.subr.mxu0 0.0
  %555 = vmatpush2.msra.mxu0 0.0
  %556 = vmatprep.subr.mxu0 0.0
  %557 = vmatpush2.msra.mxu0 0.0
  %558 = vmatprep.subr.mxu0 0.0
  %559 = vmatpush2.msra.mxu0 0.0
  %560 = vmatprep.subr.mxu0 0.0
  %561 = vmatpush2.msra.mxu0 0.0
  %562 = vmatprep.subr.mxu0 0.0
  %563 = vmatpush2.msra.mxu0 0.0
  %564 = vmatprep.subr.mxu0 0.0
  %565 = vmatpush2.msra.mxu0 0.0
  %566 = vmatprep.subr.mxu0 0.0
  %567 = vmatpush2.msra.mxu0 0.0
  %568 = vmatprep.subr.mxu0 0.0
  %569 = vmatpush2.msra.mxu0 0.0
  %570 = vmatprep.subr.mxu0 0.0
  %571 = vmatpush2.msra.mxu0 0.0
  %572 = vmatprep.subr.mxu0 0.0
  %573 = vmatpush2.msra.mxu0 0.0
  %574 = vmatprep.subr.mxu0 0.0
  %575 = vmatpush2.msra.mxu0 0.0
  %576 = vmatprep.subr.mxu0 0.0
  %577 = vmatpush2.msra.mxu0 0.0
  %578 = vmatprep.subr.mxu0 0.0
  %579 = vmatpush2.msra.mxu0 0.0
  %580 = vmatprep.subr.mxu0 0.0
  %581 = vmatpush2.msra.mxu0 0.0
  %582 = vmatprep.subr.mxu0 0.0
  %583 = vmatpush2.msra.mxu0 0.0
  %584 = vmatprep.mubr.f32.mxu0 0.0
  %585 = vmatmul.mubr.f32.gmra.mxu0 %v518
  %v586 = vpop.f32.mrf.mxu0
  %v587 = vadd.f32 0.0, %v586
  %v588 = vpop.f32.mrf.mxu0
  %589 = vdwg.mxu0
  %v591 = vrot.slane %v587, 4
  %v593 = vadd.f32 %v270, %v591
  %v594 = vxor.u32 %v593, 2147483648
  %v595 = vmul.f32 %v594, 1.442695
  %v596 = vpow.pop %v595
  %v597 = vadd.f32 %v596, 1.0
  %v598 = vrcp.pop %v597
  %v599 = vmul.f32 1.0, %v598
  %v600 = vadd.f32 %v587, %v376
  %v602 = vrot.slane %v600, 4
  %603 = vrot.lane.b32.xlu0 %v602, 96
  %v604 = vpop.permute.xlu0 %603
  %v606 = vmul.f32 %v599, %v604
  %608 = vrot.lane.b32.xlu0 %v606, 32
  %v609 = vpop.permute.xlu0 %608
  %v611 = vadd.f32 %v270, %v609
  %v612 = vtanh.pop %v611
  %v614 = vrot.slane %v612, 4
  %v616 = vsub.f32 %v400, %v614
  %v618 = vrot.slane %v616, 4
  %619 = vrot.lane.b32.xlu0 %v618, 112
  %v620 = vpop.permute.xlu0 %619
  %v622 = vmul.f32 %v599, %v620
  %624 = vrot.lane.b32.xlu0 %v622, 16
  %v625 = vpop.permute.xlu0 %624
  %v627 = vadd.f32 %v612, %v625
  %v629 = vrot.slane %v514, 4
  %630 = vrot.lane.b32.xlu0 %v629, 48
  %v631 = vpop.permute.xlu0 %630
  %v632 = vsel %vm136, %v631, 0
  %634 = vmatprep.subr.mxu0 0.0
  %635 = vmatpush1.msra.mxu0 0.0
  %636 = vmatprep.subr.mxu0 0.0
  %637 = vmatpush1.msra.mxu0 0.0
  %638 = vmatprep.subr.mxu0 0.0
  %639 = vmatpush1.msra.mxu0 0.0
  %640 = vmatprep.subr.mxu0 0.0
  %641 = vmatpush1.msra.mxu0 0.0
  %642 = vmatprep.subr.mxu0 0.0
  %643 = vmatpush1.msra.mxu0 0.0
  %644 = vmatprep.subr.mxu0 0.0
  %645 = vmatpush1.msra.mxu0 0.0
  %646 = vmatprep.subr.mxu0 0.0
  %647 = vmatpush1.msra.mxu0 0.0
  %648 = vmatprep.subr.mxu0 0.0
  %649 = vmatpush1.msra.mxu0 0.0
  %650 = vmatprep.subr.mxu0 0.0
  %651 = vmatpush1.msra.mxu0 0.0
  %652 = vmatprep.subr.mxu0 0.0
  %653 = vmatpush1.msra.mxu0 0.0
  %654 = vmatprep.subr.mxu0 0.0
  %655 = vmatpush1.msra.mxu0 0.0
  %656 = vmatprep.subr.mxu0 0.0
  %657 = vmatpush1.msra.mxu0 0.0
  %658 = vmatprep.subr.mxu0 0.0
  %659 = vmatpush1.msra.mxu0 0.0
  %660 = vmatprep.subr.mxu0 0.0
  %661 = vmatpush1.msra.mxu0 0.0
  %662 = vmatprep.subr.mxu0 0.0
  %663 = vmatpush1.msra.mxu0 %v287
  %664 = vmatprep.subr.mxu0 0.0
  %665 = vmatpush1.msra.mxu0 %v286
  %666 = vmatprep.subr.mxu0 0.0
  %667 = vmatpush2.msra.mxu0 0.0
  %668 = vmatprep.subr.mxu0 0.0
  %669 = vmatpush2.msra.mxu0 0.0
  %670 = vmatprep.subr.mxu0 0.0
  %671 = vmatpush2.msra.mxu0 0.0
  %672 = vmatprep.subr.mxu0 0.0
  %673 = vmatpush2.msra.mxu0 0.0
  %674 = vmatprep.subr.mxu0 0.0
  %675 = vmatpush2.msra.mxu0 0.0
  %676 = vmatprep.subr.mxu0 0.0
  %677 = vmatpush2.msra.mxu0 0.0
  %678 = vmatprep.subr.mxu0 0.0
  %679 = vmatpush2.msra.mxu0 0.0
  %680 = vmatprep.subr.mxu0 0.0
  %681 = vmatpush2.msra.mxu0 0.0
  %682 = vmatprep.subr.mxu0 0.0
  %683 = vmatpush2.msra.mxu0 0.0
  %684 = vmatprep.subr.mxu0 0.0
  %685 = vmatpush2.msra.mxu0 0.0
  %686 = vmatprep.subr.mxu0 0.0
  %687 = vmatpush2.msra.mxu0 0.0
  %688 = vmatprep.subr.mxu0 0.0
  %689 = vmatpush2.msra.mxu0 0.0
  %690 = vmatprep.subr.mxu0 0.0
  %691 = vmatpush2.msra.mxu0 0.0
  %692 = vmatprep.subr.mxu0 0.0
  %693 = vmatpush2.msra.mxu0 0.0
  %694 = vmatprep.subr.mxu0 0.0
  %695 = vmatpush2.msra.mxu0 0.0
  %696 = vmatprep.subr.mxu0 0.0
  %697 = vmatpush2.msra.mxu0 0.0
  %698 = vmatprep.mubr.f32.mxu0 0.0
  %699 = vmatmul.mubr.f32.gmra.mxu0 %v632
  %v700 = vpop.f32.mrf.mxu0
  %v701 = vadd.f32 0.0, %v700
  %v702 = vpop.f32.mrf.mxu0
  %703 = vdwg.mxu0
  %705 = vrot.lane.b32.xlu0 %v701, 48
  %v706 = vpop.permute.xlu0 %705
  %v708 = vadd.f32 %v281, %v706
  %v709 = vxor.u32 %v708, 2147483648
  %v710 = vmul.f32 %v709, 1.442695
  %v711 = vpow.pop %v710
  %v712 = vadd.f32 %v711, 1.0
  %v713 = vrcp.pop %v712
  %v714 = vmul.f32 1.0, %v713
  %v715 = vadd.f32 %v701, %v489
  %717 = vrot.lane.b32.xlu0 %v715, 16
  %v718 = vpop.permute.xlu0 %717
  %v720 = vmul.f32 %v714, %v718
  %722 = vrot.lane.b32.xlu0 %v720, 32
  %v723 = vpop.permute.xlu0 %722
  %v725 = vadd.f32 %v281, %v723
  %v726 = vtanh.pop %v725
  %v728 = vrot.slane %v726, 4
  %v730 = vsub.f32 %v514, %v728
  %v732 = vrot.slane %v730, 4
  %733 = vrot.lane.b32.xlu0 %v732, 112
  %v734 = vpop.permute.xlu0 %733
  %v736 = vmul.f32 %v714, %v734
  %738 = vrot.lane.b32.xlu0 %v736, 16
  %v739 = vpop.permute.xlu0 %738
  %v741 = vadd.f32 %v726, %v739
  %v743 = vrot.slane %v627, 4
  %744 = vrot.lane.b32.xlu0 %v743, 96
  %v745 = vpop.permute.xlu0 %744
  %v746 = vsel %vm136, %v745, 0
  %748 = vmatprep.subr.mxu0 0.0
  %749 = vmatpush1.msra.mxu0 0.0
  %750 = vmatprep.subr.mxu0 0.0
  %751 = vmatpush1.msra.mxu0 0.0
  %752 = vmatprep.subr.mxu0 0.0
  %753 = vmatpush1.msra.mxu0 0.0
  %754 = vmatprep.subr.mxu0 0.0
  %755 = vmatpush1.msra.mxu0 0.0
  %756 = vmatprep.subr.mxu0 0.0
  %757 = vmatpush1.msra.mxu0 0.0
  %758 = vmatprep.subr.mxu0 0.0
  %759 = vmatpush1.msra.mxu0 0.0
  %760 = vmatprep.subr.mxu0 0.0
  %761 = vmatpush1.msra.mxu0 0.0
  %762 = vmatprep.subr.mxu0 0.0
  %763 = vmatpush1.msra.mxu0 0.0
  %764 = vmatprep.subr.mxu0 0.0
  %765 = vmatpush1.msra.mxu0 0.0
  %766 = vmatprep.subr.mxu0 0.0
  %767 = vmatpush1.msra.mxu0 0.0
  %768 = vmatprep.subr.mxu0 0.0
  %769 = vmatpush1.msra.mxu0 0.0
  %770 = vmatprep.subr.mxu0 0.0
  %771 = vmatpush1.msra.mxu0 0.0
  %772 = vmatprep.subr.mxu0 0.0
  %773 = vmatpush1.msra.mxu0 0.0
  %774 = vmatprep.subr.mxu0 0.0
  %775 = vmatpush1.msra.mxu0 0.0
  %776 = vmatprep.subr.mxu0 0.0
  %777 = vmatpush1.msra.mxu0 %v285
  %778 = vmatprep.subr.mxu0 0.0
  %779 = vmatpush1.msra.mxu0 %v284
  %780 = vmatprep.subr.mxu0 0.0
  %781 = vmatpush2.msra.mxu0 0.0
  %782 = vmatprep.subr.mxu0 0.0
  %783 = vmatpush2.msra.mxu0 0.0
  %784 = vmatprep.subr.mxu0 0.0
  %785 = vmatpush2.msra.mxu0 0.0
  %786 = vmatprep.subr.mxu0 0.0
  %787 = vmatpush2.msra.mxu0 0.0
  %788 = vmatprep.subr.mxu0 0.0
  %789 = vmatpush2.msra.mxu0 0.0
  %790 = vmatprep.subr.mxu0 0.0
  %791 = vmatpush2.msra.mxu0 0.0
  %792 = vmatprep.subr.mxu0 0.0
  %793 = vmatpush2.msra.mxu0 0.0
  %794 = vmatprep.subr.mxu0 0.0
  %795 = vmatpush2.msra.mxu0 0.0
  %796 = vmatprep.subr.mxu0 0.0
  %797 = vmatpush2.msra.mxu0 0.0
  %798 = vmatprep.subr.mxu0 0.0
  %799 = vmatpush2.msra.mxu0 0.0
  %800 = vmatprep.subr.mxu0 0.0
  %801 = vmatpush2.msra.mxu0 0.0
  %802 = vmatprep.subr.mxu0 0.0
  %803 = vmatpush2.msra.mxu0 0.0
  %804 = vmatprep.subr.mxu0 0.0
  %805 = vmatpush2.msra.mxu0 0.0
  %806 = vmatprep.subr.mxu0 0.0
  %807 = vmatpush2.msra.mxu0 0.0
  %808 = vmatprep.subr.mxu0 0.0
  %809 = vmatpush2.msra.mxu0 0.0
  %810 = vmatprep.subr.mxu0 0.0
  %811 = vmatpush2.msra.mxu0 0.0
  %812 = vmatprep.mubr.f32.mxu0 0.0
  %813 = vmatmul.mubr.f32.gmra.mxu0 %v746
  %v814 = vpop.f32.mrf.mxu0
  %v815 = vadd.f32 0.0, %v814
  %v816 = vpop.f32.mrf.mxu0
  %817 = vdwg.mxu0
  %v818 = vadd.f32 %v273, %v815
  %v819 = vxor.u32 %v818, 2147483648
  %v820 = vmul.f32 %v819, 1.442695
  %v821 = vpow.pop %v820
  %v822 = vadd.f32 %v821, 1.0
  %v823 = vrcp.pop %v822
  %v824 = vmul.f32 1.0, %v823
  %v825 = vadd.f32 %v815, %v376
  %827 = vrot.lane.b32.xlu0 %v825, 96
  %v828 = vpop.permute.xlu0 %827
  %v830 = vmul.f32 %v824, %v828
  %832 = vrot.lane.b32.xlu0 %v830, 32
  %v833 = vpop.permute.xlu0 %832
  %v835 = vadd.f32 %v273, %v833
  %v836 = vtanh.pop %v835
  %v838 = vrot.slane %v836, 4
  %v840 = vsub.f32 %v627, %v838
  %v842 = vrot.slane %v840, 4
  %843 = vrot.lane.b32.xlu0 %v842, 112
  %v844 = vpop.permute.xlu0 %843
  %v846 = vmul.f32 %v824, %v844
  %848 = vrot.lane.b32.xlu0 %v846, 16
  %v849 = vpop.permute.xlu0 %848
  %v851 = vadd.f32 %v836, %v849
  %853 = vrot.lane.b32.xlu0 %v741, 48
  %v854 = vpop.permute.xlu0 %853
  %v855 = vsel %vm136, %v854, 0
  %857 = vmatprep.subr.mxu0 0.0
  %858 = vmatpush1.msra.mxu0 0.0
  %859 = vmatprep.subr.mxu0 0.0
  %860 = vmatpush1.msra.mxu0 0.0
  %861 = vmatprep.subr.mxu0 0.0
  %862 = vmatpush1.msra.mxu0 0.0
  %863 = vmatprep.subr.mxu0 0.0
  %864 = vmatpush1.msra.mxu0 0.0
  %865 = vmatprep.subr.mxu0 0.0
  %866 = vmatpush1.msra.mxu0 0.0
  %867 = vmatprep.subr.mxu0 0.0
  %868 = vmatpush1.msra.mxu0 0.0
  %869 = vmatprep.subr.mxu0 0.0
  %870 = vmatpush1.msra.mxu0 0.0
  %871 = vmatprep.subr.mxu0 0.0
  %872 = vmatpush1.msra.mxu0 0.0
  %873 = vmatprep.subr.mxu0 0.0
  %874 = vmatpush1.msra.mxu0 0.0
  %875 = vmatprep.subr.mxu0 0.0
  %876 = vmatpush1.msra.mxu0 0.0
  %877 = vmatprep.subr.mxu0 0.0
  %878 = vmatpush1.msra.mxu0 0.0
  %879 = vmatprep.subr.mxu0 0.0
  %880 = vmatpush1.msra.mxu0 0.0
  %881 = vmatprep.subr.mxu0 0.0
  %882 = vmatpush1.msra.mxu0 0.0
  %883 = vmatprep.subr.mxu0 0.0
  %884 = vmatpush1.msra.mxu0 0.0
  %885 = vmatprep.subr.mxu0 0.0
  %886 = vmatpush1.msra.mxu0 %v287
  %887 = vmatprep.subr.mxu0 0.0
  %888 = vmatpush1.msra.mxu0 %v286
  %889 = vmatprep.subr.mxu0 0.0
  %890 = vmatpush2.msra.mxu0 0.0
  %891 = vmatprep.subr.mxu0 0.0
  %892 = vmatpush2.msra.mxu0 0.0
  %893 = vmatprep.subr.mxu0 0.0
  %894 = vmatpush2.msra.mxu0 0.0
  %895 = vmatprep.subr.mxu0 0.0
  %896 = vmatpush2.msra.mxu0 0.0
  %897 = vmatprep.subr.mxu0 0.0
  %898 = vmatpush2.msra.mxu0 0.0
  %899 = vmatprep.subr.mxu0 0.0
  %900 = vmatpush2.msra.mxu0 0.0
  %901 = vmatprep.subr.mxu0 0.0
  %902 = vmatpush2.msra.mxu0 0.0
  %903 = vmatprep.subr.mxu0 0.0
  %904 = vmatpush2.msra.mxu0 0.0
  %905 = vmatprep.subr.mxu0 0.0
  %906 = vmatpush2.msra.mxu0 0.0
  %907 = vmatprep.subr.mxu0 0.0
  %908 = vmatpush2.msra.mxu0 0.0
  %909 = vmatprep.subr.mxu0 0.0
  %910 = vmatpush2.msra.mxu0 0.0
  %911 = vmatprep.subr.mxu0 0.0
  %912 = vmatpush2.msra.mxu0 0.0
  %913 = vmatprep.subr.mxu0 0.0
  %914 = vmatpush2.msra.mxu0 0.0
  %915 = vmatprep.subr.mxu0 0.0
  %916 = vmatpush2.msra.mxu0 0.0
  %917 = vmatprep.subr.mxu0 0.0
  %918 = vmatpush2.msra.mxu0 0.0
  %919 = vmatprep.subr.mxu0 0.0
  %920 = vmatpush2.msra.mxu0 0.0
  %921 = vmatprep.mubr.f32.mxu0 0.0
  %922 = vmatmul.mubr.f32.gmra.mxu0 %v855
  %v923 = vpop.f32.mrf.mxu0
  %v924 = vadd.f32 0.0, %v923
  %v925 = vpop.f32.mrf.mxu0
  %926 = vdwg.mxu0
  %v928 = vrot.slane %v924, 4
  %929 = vrot.lane.b32.xlu0 %v928, 48
  %v930 = vpop.permute.xlu0 %929
  %v932 = vadd.f32 %v278, %v930
  %v933 = vxor.u32 %v932, 2147483648
  %v934 = vmul.f32 %v933, 1.442695
  %v935 = vpow.pop %v934
  %v936 = vadd.f32 %v935, 1.0
  %v937 = vrcp.pop %v936
  %v938 = vmul.f32 1.0, %v937
  %v939 = vadd.f32 %v924, %v489
  %v941 = vrot.slane %v939, 4
  %942 = vrot.lane.b32.xlu0 %v941, 16
  %v943 = vpop.permute.xlu0 %942
  %v945 = vmul.f32 %v938, %v943
  %947 = vrot.lane.b32.xlu0 %v945, 32
  %v948 = vpop.permute.xlu0 %947
  %v950 = vadd.f32 %v278, %v948
  %v951 = vtanh.pop %v950
  %v953 = vrot.slane %v951, 4
  %v955 = vsub.f32 %v741, %v953
  %v957 = vrot.slane %v955, 4
  %958 = vrot.lane.b32.xlu0 %v957, 112
  %v959 = vpop.permute.xlu0 %958
  %v961 = vmul.f32 %v938, %v959
  %963 = vrot.lane.b32.xlu0 %v961, 16
  %v964 = vpop.permute.xlu0 %963
  %v966 = vadd.f32 %v951, %v964
  %968 = vrot.lane.b32.xlu0 %v851, 96
  %v969 = vpop.permute.xlu0 %968
  %v970 = vsel %vm136, %v969, 0
  %972 = vmatprep.subr.mxu0 0.0
  %973 = vmatpush1.msra.mxu0 0.0
  %974 = vmatprep.subr.mxu0 0.0
  %975 = vmatpush1.msra.mxu0 0.0
  %976 = vmatprep.subr.mxu0 0.0
  %977 = vmatpush1.msra.mxu0 0.0
  %978 = vmatprep.subr.mxu0 0.0
  %979 = vmatpush1.msra.mxu0 0.0
  %980 = vmatprep.subr.mxu0 0.0
  %981 = vmatpush1.msra.mxu0 0.0
  %982 = vmatprep.subr.mxu0 0.0
  %983 = vmatpush1.msra.mxu0 0.0
  %984 = vmatprep.subr.mxu0 0.0
  %985 = vmatpush1.msra.mxu0 0.0
  %986 = vmatprep.subr.mxu0 0.0
  %987 = vmatpush1.msra.mxu0 0.0
  %988 = vmatprep.subr.mxu0 0.0
  %989 = vmatpush1.msra.mxu0 0.0
  %990 = vmatprep.subr.mxu0 0.0
  %991 = vmatpush1.msra.mxu0 0.0
  %992 = vmatprep.subr.mxu0 0.0
  %993 = vmatpush1.msra.mxu0 0.0
  %994 = vmatprep.subr.mxu0 0.0
  %995 = vmatpush1.msra.mxu0 0.0
  %996 = vmatprep.subr.mxu0 0.0
  %997 = vmatpush1.msra.mxu0 0.0
  %998 = vmatprep.subr.mxu0 0.0
  %999 = vmatpush1.msra.mxu0 0.0
  %1000 = vmatprep.subr.mxu0 0.0
  %1001 = vmatpush1.msra.mxu0 %v285
  %1002 = vmatprep.subr.mxu0 0.0
  %1003 = vmatpush1.msra.mxu0 %v284
  %1004 = vmatprep.subr.mxu0 0.0
  %1005 = vmatpush2.msra.mxu0 0.0
  %1006 = vmatprep.subr.mxu0 0.0
  %1007 = vmatpush2.msra.mxu0 0.0
  %1008 = vmatprep.subr.mxu0 0.0
  %1009 = vmatpush2.msra.mxu0 0.0
  %1010 = vmatprep.subr.mxu0 0.0
  %1011 = vmatpush2.msra.mxu0 0.0
  %1012 = vmatprep.subr.mxu0 0.0
  %1013 = vmatpush2.msra.mxu0 0.0
  %1014 = vmatprep.subr.mxu0 0.0
  %1015 = vmatpush2.msra.mxu0 0.0
  %1016 = vmatprep.subr.mxu0 0.0
  %1017 = vmatpush2.msra.mxu0 0.0
  %1018 = vmatprep.subr.mxu0 0.0
  %1019 = vmatpush2.msra.mxu0 0.0
  %1020 = vmatprep.subr.mxu0 0.0
  %1021 = vmatpush2.msra.mxu0 0.0
  %1022 = vmatprep.subr.mxu0 0.0
  %1023 = vmatpush2.msra.mxu0 0.0
  %1024 = vmatprep.subr.mxu0 0.0
  %1025 = vmatpush2.msra.mxu0 0.0
  %1026 = vmatprep.subr.mxu0 0.0
  %1027 = vmatpush2.msra.mxu0 0.0
  %1028 = vmatprep.subr.mxu0 0.0
  %1029 = vmatpush2.msra.mxu0 0.0
  %1030 = vmatprep.subr.mxu0 0.0
  %1031 = vmatpush2.msra.mxu0 0.0
  %1032 = vmatprep.subr.mxu0 0.0
  %1033 = vmatpush2.msra.mxu0 0.0
  %1034 = vmatprep.subr.mxu0 0.0
  %1035 = vmatpush2.msra.mxu0 0.0
  %1036 = vmatprep.mubr.f32.mxu0 0.0
  %1037 = vmatmul.mubr.f32.gmra.mxu0 %v970
  %v1038 = vpop.f32.mrf.mxu0
  %v1039 = vadd.f32 0.0, %v1038
  %v1040 = vpop.f32.mrf.mxu0
  %1041 = vdwg.mxu0
  %v1043 = vrot.slane %v1039, 4
  %v1045 = vadd.f32 %v273, %v1043
  %v1046 = vxor.u32 %v1045, 2147483648
  %v1047 = vmul.f32 %v1046, 1.442695
  %v1048 = vpow.pop %v1047
  %v1049 = vadd.f32 %v1048, 1.0
  %v1050 = vrcp.pop %v1049
  %v1051 = vmul.f32 1.0, %v1050
  %v1052 = vadd.f32 %v1039, %v376
  %v1054 = vrot.slane %v1052, 4
  %1055 = vrot.lane.b32.xlu0 %v1054, 96
  %v1056 = vpop.permute.xlu0 %1055
  %v1058 = vmul.f32 %v1051, %v1056
  %1060 = vrot.lane.b32.xlu0 %v1058, 32
  %v1061 = vpop.permute.xlu0 %1060
  %v1063 = vadd.f32 %v273, %v1061
  %v1064 = vtanh.pop %v1063
  %v1066 = vrot.slane %v1064, 4
  %v1068 = vsub.f32 %v851, %v1066
  %v1070 = vrot.slane %v1068, 4
  %1071 = vrot.lane.b32.xlu0 %v1070, 112
  %v1072 = vpop.permute.xlu0 %1071
  %v1074 = vmul.f32 %v1051, %v1072
  %1076 = vrot.lane.b32.xlu0 %v1074, 16
  %v1077 = vpop.permute.xlu0 %1076
  %v1079 = vadd.f32 %v1064, %v1077
  %v1081 = vrot.slane %v966, 4
  %1082 = vrot.lane.b32.xlu0 %v1081, 48
  %v1083 = vpop.permute.xlu0 %1082
  %v1084 = vsel %vm136, %v1083, 0
  %1086 = vmatprep.subr.mxu0 0.0
  %1087 = vmatpush1.msra.mxu0 0.0
  %1088 = vmatprep.subr.mxu0 0.0
  %1089 = vmatpush1.msra.mxu0 0.0
  %1090 = vmatprep.subr.mxu0 0.0
  %1091 = vmatpush1.msra.mxu0 0.0
  %1092 = vmatprep.subr.mxu0 0.0
  %1093 = vmatpush1.msra.mxu0 0.0
  %1094 = vmatprep.subr.mxu0 0.0
  %1095 = vmatpush1.msra.mxu0 0.0
  %1096 = vmatprep.subr.mxu0 0.0
  %1097 = vmatpush1.msra.mxu0 0.0
  %1098 = vmatprep.subr.mxu0 0.0
  %1099 = vmatpush1.msra.mxu0 0.0
  %1100 = vmatprep.subr.mxu0 0.0
  %1101 = vmatpush1.msra.mxu0 0.0
  %1102 = vmatprep.subr.mxu0 0.0
  %1103 = vmatpush1.msra.mxu0 0.0
  %1104 = vmatprep.subr.mxu0 0.0
  %1105 = vmatpush1.msra.mxu0 0.0
  %1106 = vmatprep.subr.mxu0 0.0
  %1107 = vmatpush1.msra.mxu0 0.0
  %1108 = vmatprep.subr.mxu0 0.0
  %1109 = vmatpush1.msra.mxu0 0.0
  %1110 = vmatprep.subr.mxu0 0.0
  %1111 = vmatpush1.msra.mxu0 0.0
  %1112 = vmatprep.subr.mxu0 0.0
  %1113 = vmatpush1.msra.mxu0 0.0
  %1114 = vmatprep.subr.mxu0 0.0
  %1115 = vmatpush1.msra.mxu0 %v287
  %1116 = vmatprep.subr.mxu0 0.0
  %1117 = vmatpush1.msra.mxu0 %v286
  %1118 = vmatprep.subr.mxu0 0.0
  %1119 = vmatpush2.msra.mxu0 0.0
  %1120 = vmatprep.subr.mxu0 0.0
  %1121 = vmatpush2.msra.mxu0 0.0
  %1122 = vmatprep.subr.mxu0 0.0
  %1123 = vmatpush2.msra.mxu0 0.0
  %1124 = vmatprep.subr.mxu0 0.0
  %1125 = vmatpush2.msra.mxu0 0.0
  %1126 = vmatprep.subr.mxu0 0.0
  %1127 = vmatpush2.msra.mxu0 0.0
  %1128 = vmatprep.subr.mxu0 0.0
  %1129 = vmatpush2.msra.mxu0 0.0
  %1130 = vmatprep.subr.mxu0 0.0
  %1131 = vmatpush2.msra.mxu0 0.0
  %1132 = vmatprep.subr.mxu0 0.0
  %1133 = vmatpush2.msra.mxu0 0.0
  %1134 = vmatprep.subr.mxu0 0.0
  %1135 = vmatpush2.msra.mxu0 0.0
  %1136 = vmatprep.subr.mxu0 0.0
  %1137 = vmatpush2.msra.mxu0 0.0
  %1138 = vmatprep.subr.mxu0 0.0
  %1139 = vmatpush2.msra.mxu0 0.0
  %1140 = vmatprep.subr.mxu0 0.0
  %1141 = vmatpush2.msra.mxu0 0.0
  %1142 = vmatprep.subr.mxu0 0.0
  %1143 = vmatpush2.msra.mxu0 0.0
  %1144 = vmatprep.subr.mxu0 0.0
  %1145 = vmatpush2.msra.mxu0 0.0
  %1146 = vmatprep.subr.mxu0 0.0
  %1147 = vmatpush2.msra.mxu0 0.0
  %1148 = vmatprep.subr.mxu0 0.0
  %1149 = vmatpush2.msra.mxu0 0.0
  %1150 = vmatprep.mubr.f32.mxu0 0.0
  %1151 = vmatmul.mubr.f32.gmra.mxu0 %v1084
  %v1152 = vpop.f32.mrf.mxu0
  %v1153 = vadd.f32 0.0, %v1152
  %v1154 = vpop.f32.mrf.mxu0
  %1155 = vdwg.mxu0
  %1157 = vrot.lane.b32.xlu0 %v1153, 48
  %v1158 = vpop.permute.xlu0 %1157
  %v1160 = vadd.f32 %v278, %v1158
  %v1161 = vxor.u32 %v1160, 2147483648
  %v1162 = vmul.f32 %v1161, 1.442695
  %v1163 = vpow.pop %v1162
  %v1164 = vadd.f32 %v1163, 1.0
  %v1165 = vrcp.pop %v1164
  %v1166 = vmul.f32 1.0, %v1165
  %v1167 = vadd.f32 %v1153, %v489
  %1169 = vrot.lane.b32.xlu0 %v1167, 16
  %v1170 = vpop.permute.xlu0 %1169
  %v1172 = vmul.f32 %v1166, %v1170
  %1174 = vrot.lane.b32.xlu0 %v1172, 32
  %v1175 = vpop.permute.xlu0 %1174
  %v1177 = vadd.f32 %v278, %v1175
  %v1178 = vtanh.pop %v1177
  %v1180 = vrot.slane %v1178, 4
  %v1182 = vsub.f32 %v966, %v1180
  %v1184 = vrot.slane %v1182, 4
  %1185 = vrot.lane.b32.xlu0 %v1184, 112
  %v1186 = vpop.permute.xlu0 %1185
  %v1188 = vmul.f32 %v1166, %v1186
  %1190 = vrot.lane.b32.xlu0 %v1188, 16
  %v1191 = vpop.permute.xlu0 %1190
  %v1193 = vadd.f32 %v1178, %v1191
  %v1195 = vrot.slane %v1079, 4
  %1196 = vrot.lane.b32.xlu0 %v1195, 96
  %v1197 = vpop.permute.xlu0 %1196
  %v1198 = vsel %vm136, %v1197, 0
  %1200 = vmatprep.subr.mxu0 0.0
  %1201 = vmatpush1.msra.mxu0 0.0
  %1202 = vmatprep.subr.mxu0 0.0
  %1203 = vmatpush1.msra.mxu0 0.0
  %1204 = vmatprep.subr.mxu0 0.0
  %1205 = vmatpush1.msra.mxu0 0.0
  %1206 = vmatprep.subr.mxu0 0.0
  %1207 = vmatpush1.msra.mxu0 0.0
  %1208 = vmatprep.subr.mxu0 0.0
  %1209 = vmatpush1.msra.mxu0 0.0
  %1210 = vmatprep.subr.mxu0 0.0
  %1211 = vmatpush1.msra.mxu0 0.0
  %1212 = vmatprep.subr.mxu0 0.0
  %1213 = vmatpush1.msra.mxu0 0.0
  %1214 = vmatprep.subr.mxu0 0.0
  %1215 = vmatpush1.msra.mxu0 0.0
  %1216 = vmatprep.subr.mxu0 0.0
  %1217 = vmatpush1.msra.mxu0 0.0
  %1218 = vmatprep.subr.mxu0 0.0
  %1219 = vmatpush1.msra.mxu0 0.0
  %1220 = vmatprep.subr.mxu0 0.0
  %1221 = vmatpush1.msra.mxu0 0.0
  %1222 = vmatprep.subr.mxu0 0.0
  %1223 = vmatpush1.msra.mxu0 0.0
  %1224 = vmatprep.subr.mxu0 0.0
  %1225 = vmatpush1.msra.mxu0 0.0
  %1226 = vmatprep.subr.mxu0 0.0
  %1227 = vmatpush1.msra.mxu0 0.0
  %1228 = vmatprep.subr.mxu0 0.0
  %1229 = vmatpush1.msra.mxu0 %v285
  %1230 = vmatprep.subr.mxu0 0.0
  %1231 = vmatpush1.msra.mxu0 %v284
  %1232 = vmatprep.subr.mxu0 0.0
  %1233 = vmatpush2.msra.mxu0 0.0
  %1234 = vmatprep.subr.mxu0 0.0
  %1235 = vmatpush2.msra.mxu0 0.0
  %1236 = vmatprep.subr.mxu0 0.0
  %1237 = vmatpush2.msra.mxu0 0.0
  %1238 = vmatprep.subr.mxu0 0.0
  %1239 = vmatpush2.msra.mxu0 0.0
  %1240 = vmatprep.subr.mxu0 0.0
  %1241 = vmatpush2.msra.mxu0 0.0
  %1242 = vmatprep.subr.mxu0 0.0
  %1243 = vmatpush2.msra.mxu0 0.0
  %1244 = vmatprep.subr.mxu0 0.0
  %1245 = vmatpush2.msra.mxu0 0.0
  %1246 = vmatprep.subr.mxu0 0.0
  %1247 = vmatpush2.msra.mxu0 0.0
  %1248 = vmatprep.subr.mxu0 0.0
  %1249 = vmatpush2.msra.mxu0 0.0
  %1250 = vmatprep.subr.mxu0 0.0
  %1251 = vmatpush2.msra.mxu0 0.0
  %1252 = vmatprep.subr.mxu0 0.0
  %1253 = vmatpush2.msra.mxu0 0.0
  %1254 = vmatprep.subr.mxu0 0.0
  %1255 = vmatpush2.msra.mxu0 0.0
  %1256 = vmatprep.subr.mxu0 0.0
  %1257 = vmatpush2.msra.mxu0 0.0
  %1258 = vmatprep.subr.mxu0 0.0
  %1259 = vmatpush2.msra.mxu0 0.0
  %1260 = vmatprep.subr.mxu0 0.0
  %1261 = vmatpush2.msra.mxu0 0.0
  %1262 = vmatprep.subr.mxu0 0.0
  %1263 = vmatpush2.msra.mxu0 0.0
  %1264 = vmatprep.mubr.f32.mxu0 0.0
  %1265 = vmatmul.mubr.f32.gmra.mxu0 %v1198
  %v1266 = vpop.f32.mrf.mxu0
  %v1267 = vadd.f32 0.0, %v1266
  %v1268 = vpop.f32.mrf.mxu0
  %1269 = vdwg.mxu0
  %v1270 = vadd.f32 %v278, %v1267
  %v1271 = vxor.u32 %v1270, 2147483648
  %v1272 = vmul.f32 %v1271, 1.442695
  %v1273 = vpow.pop %v1272
  %v1274 = vadd.f32 %v1273, 1.0
  %v1275 = vrcp.pop %v1274
  %v1276 = vmul.f32 1.0, %v1275
  %v1277 = vadd.f32 %v1267, %v376
  %1279 = vrot.lane.b32.xlu0 %v1277, 96
  %v1280 = vpop.permute.xlu0 %1279
  %v1282 = vmul.f32 %v1276, %v1280
  %1284 = vrot.lane.b32.xlu0 %v1282, 32
  %v1285 = vpop.permute.xlu0 %1284
  %v1287 = vadd.f32 %v278, %v1285
  %v1288 = vtanh.pop %v1287
  %v1290 = vrot.slane %v1288, 4
  %v1292 = vsub.f32 %v1079, %v1290
  %v1294 = vrot.slane %v1292, 4
  %1295 = vrot.lane.b32.xlu0 %v1294, 112
  %v1296 = vpop.permute.xlu0 %1295
  %v1298 = vmul.f32 %v1276, %v1296
  %1300 = vrot.lane.b32.xlu0 %v1298, 16
  %v1301 = vpop.permute.xlu0 %1300
  %v1303 = vadd.f32 %v1288, %v1301
  %1305 = vrot.lane.b32.xlu0 %v1193, 48
  %v1306 = vpop.permute.xlu0 %1305
  %v1307 = vsel %vm136, %v1306, 0
  %1309 = vmatprep.subr.mxu0 0.0
  %1310 = vmatpush1.msra.mxu0 0.0
  %1311 = vmatprep.subr.mxu0 0.0
  %1312 = vmatpush1.msra.mxu0 0.0
  %1313 = vmatprep.subr.mxu0 0.0
  %1314 = vmatpush1.msra.mxu0 0.0
  %1315 = vmatprep.subr.mxu0 0.0
  %1316 = vmatpush1.msra.mxu0 0.0
  %1317 = vmatprep.subr.mxu0 0.0
  %1318 = vmatpush1.msra.mxu0 0.0
  %1319 = vmatprep.subr.mxu0 0.0
  %1320 = vmatpush1.msra.mxu0 0.0
  %1321 = vmatprep.subr.mxu0 0.0
  %1322 = vmatpush1.msra.mxu0 0.0
  %1323 = vmatprep.subr.mxu0 0.0
  %1324 = vmatpush1.msra.mxu0 0.0
  %1325 = vmatprep.subr.mxu0 0.0
  %1326 = vmatpush1.msra.mxu0 0.0
  %1327 = vmatprep.subr.mxu0 0.0
  %1328 = vmatpush1.msra.mxu0 0.0
  %1329 = vmatprep.subr.mxu0 0.0
  %1330 = vmatpush1.msra.mxu0 0.0
  %1331 = vmatprep.subr.mxu0 0.0
  %1332 = vmatpush1.msra.mxu0 0.0
  %1333 = vmatprep.subr.mxu0 0.0
  %1334 = vmatpush1.msra.mxu0 0.0
  %1335 = vmatprep.subr.mxu0 0.0
  %1336 = vmatpush1.msra.mxu0 0.0
  %1337 = vmatprep.subr.mxu0 0.0
  %1338 = vmatpush1.msra.mxu0 %v287
  %1339 = vmatprep.subr.mxu0 0.0
  %1340 = vmatpush1.msra.mxu0 %v286
  %1341 = vmatprep.subr.mxu0 0.0
  %1342 = vmatpush2.msra.mxu0 0.0
  %1343 = vmatprep.subr.mxu0 0.0
  %1344 = vmatpush2.msra.mxu0 0.0
  %1345 = vmatprep.subr.mxu0 0.0
  %1346 = vmatpush2.msra.mxu0 0.0
  %1347 = vmatprep.subr.mxu0 0.0
  %1348 = vmatpush2.msra.mxu0 0.0
  %1349 = vmatprep.subr.mxu0 0.0
  %1350 = vmatpush2.msra.mxu0 0.0
  %1351 = vmatprep.subr.mxu0 0.0
  %1352 = vmatpush2.msra.mxu0 0.0
  %1353 = vmatprep.subr.mxu0 0.0
  %1354 = vmatpush2.msra.mxu0 0.0
  %1355 = vmatprep.subr.mxu0 0.0
  %1356 = vmatpush2.msra.mxu0 0.0
  %1357 = vmatprep.subr.mxu0 0.0
  %1358 = vmatpush2.msra.mxu0 0.0
  %1359 = vmatprep.subr.mxu0 0.0
  %1360 = vmatpush2.msra.mxu0 0.0
  %1361 = vmatprep.subr.mxu0 0.0
  %1362 = vmatpush2.msra.mxu0 0.0
  %1363 = vmatprep.subr.mxu0 0.0
  %1364 = vmatpush2.msra.mxu0 0.0
  %1365 = vmatprep.subr.mxu0 0.0
  %1366 = vmatpush2.msra.mxu0 0.0
  %1367 = vmatprep.subr.mxu0 0.0
  %1368 = vmatpush2.msra.mxu0 0.0
  %1369 = vmatprep.subr.mxu0 0.0
  %1370 = vmatpush2.msra.mxu0 0.0
  %1371 = vmatprep.subr.mxu0 0.0
  %1372 = vmatpush2.msra.mxu0 0.0
  %1373 = vmatprep.mubr.f32.mxu0 0.0
  %1374 = vmatmul.mubr.f32.gmra.mxu0 %v1307
  %v1375 = vpop.f32.mrf.mxu0
  %v1376 = vadd.f32 0.0, %v1375
  %v1377 = vpop.f32.mrf.mxu0
  %1378 = vdwg.mxu0
  %v1380 = vrot.slane %v1376, 4
  %1381 = vrot.lane.b32.xlu0 %v1380, 48
  %v1382 = vpop.permute.xlu0 %1381
  %v1384 = vadd.f32 %v273, %v1382
  %v1385 = vxor.u32 %v1384, 2147483648
  %v1386 = vmul.f32 %v1385, 1.442695
  %v1387 = vpow.pop %v1386
  %v1388 = vadd.f32 %v1387, 1.0
  %v1389 = vrcp.pop %v1388
  %v1390 = vmul.f32 1.0, %v1389
  %v1391 = vadd.f32 %v1376, %v489
  %v1393 = vrot.slane %v1391, 4
  %1394 = vrot.lane.b32.xlu0 %v1393, 16
  %v1395 = vpop.permute.xlu0 %1394
  %v1397 = vmul.f32 %v1390, %v1395
  %1399 = vrot.lane.b32.xlu0 %v1397, 32
  %v1400 = vpop.permute.xlu0 %1399
  %v1402 = vadd.f32 %v273, %v1400
  %v1403 = vtanh.pop %v1402
  %v1405 = vrot.slane %v1403, 4
  %v1407 = vsub.f32 %v1193, %v1405
  %v1409 = vrot.slane %v1407, 4
  %1410 = vrot.lane.b32.xlu0 %v1409, 112
  %v1411 = vpop.permute.xlu0 %1410
  %v1413 = vmul.f32 %v1390, %v1411
  %1415 = vrot.lane.b32.xlu0 %v1413, 16
  %v1416 = vpop.permute.xlu0 %1415
  %v1418 = vadd.f32 %v1403, %v1416
  %1420 = vrot.lane.b32.xlu0 %v1303, 96
  %v1421 = vpop.permute.xlu0 %1420
  %v1422 = vsel %vm136, %v1421, 0
  %1424 = vmatprep.subr.mxu0 0.0
  %1425 = vmatpush1.msra.mxu0 0.0
  %1426 = vmatprep.subr.mxu0 0.0
  %1427 = vmatpush1.msra.mxu0 0.0
  %1428 = vmatprep.subr.mxu0 0.0
  %1429 = vmatpush1.msra.mxu0 0.0
  %1430 = vmatprep.subr.mxu0 0.0
  %1431 = vmatpush1.msra.mxu0 0.0
  %1432 = vmatprep.subr.mxu0 0.0
  %1433 = vmatpush1.msra.mxu0 0.0
  %1434 = vmatprep.subr.mxu0 0.0
  %1435 = vmatpush1.msra.mxu0 0.0
  %1436 = vmatprep.subr.mxu0 0.0
  %1437 = vmatpush1.msra.mxu0 0.0
  %1438 = vmatprep.subr.mxu0 0.0
  %1439 = vmatpush1.msra.mxu0 0.0
  %1440 = vmatprep.subr.mxu0 0.0
  %1441 = vmatpush1.msra.mxu0 0.0
  %1442 = vmatprep.subr.mxu0 0.0
  %1443 = vmatpush1.msra.mxu0 0.0
  %1444 = vmatprep.subr.mxu0 0.0
  %1445 = vmatpush1.msra.mxu0 0.0
  %1446 = vmatprep.subr.mxu0 0.0
  %1447 = vmatpush1.msra.mxu0 0.0
  %1448 = vmatprep.subr.mxu0 0.0
  %1449 = vmatpush1.msra.mxu0 0.0
  %1450 = vmatprep.subr.mxu0 0.0
  %1451 = vmatpush1.msra.mxu0 0.0
  %1452 = vmatprep.subr.mxu0 0.0
  %1453 = vmatpush1.msra.mxu0 %v285
  %1454 = vmatprep.subr.mxu0 0.0
  %1455 = vmatpush1.msra.mxu0 %v284
  %1456 = vmatprep.subr.mxu0 0.0
  %1457 = vmatpush2.msra.mxu0 0.0
  %1458 = vmatprep.subr.mxu0 0.0
  %1459 = vmatpush2.msra.mxu0 0.0
  %1460 = vmatprep.subr.mxu0 0.0
  %1461 = vmatpush2.msra.mxu0 0.0
  %1462 = vmatprep.subr.mxu0 0.0
  %1463 = vmatpush2.msra.mxu0 0.0
  %1464 = vmatprep.subr.mxu0 0.0
  %1465 = vmatpush2.msra.mxu0 0.0
  %1466 = vmatprep.subr.mxu0 0.0
  %1467 = vmatpush2.msra.mxu0 0.0
  %1468 = vmatprep.subr.mxu0 0.0
  %1469 = vmatpush2.msra.mxu0 0.0
  %1470 = vmatprep.subr.mxu0 0.0
  %1471 = vmatpush2.msra.mxu0 0.0
  %1472 = vmatprep.subr.mxu0 0.0
  %1473 = vmatpush2.msra.mxu0 0.0
  %1474 = vmatprep.subr.mxu0 0.0
  %1475 = vmatpush2.msra.mxu0 0.0
  %1476 = vmatprep.subr.mxu0 0.0
  %1477 = vmatpush2.msra.mxu0 0.0
  %1478 = vmatprep.subr.mxu0 0.0
  %1479 = vmatpush2.msra.mxu0 0.0
  %1480 = vmatprep.subr.mxu0 0.0
  %1481 = vmatpush2.msra.mxu0 0.0
  %1482 = vmatprep.subr.mxu0 0.0
  %1483 = vmatpush2.msra.mxu0 0.0
  %1484 = vmatprep.subr.mxu0 0.0
  %1485 = vmatpush2.msra.mxu0 0.0
  %1486 = vmatprep.subr.mxu0 0.0
  %1487 = vmatpush2.msra.mxu0 0.0
  %1488 = vmatprep.mubr.f32.mxu0 0.0
  %1489 = vmatmul.mubr.f32.gmra.mxu0 %v1422
  %v1490 = vpop.f32.mrf.mxu0
  %v1491 = vadd.f32 0.0, %v1490
  %v1492 = vpop.f32.mrf.mxu0
  %1493 = vdwg.mxu0
  %v1495 = vrot.slane %v1491, 4
  %v1497 = vadd.f32 %v278, %v1495
  %v1498 = vxor.u32 %v1497, 2147483648
  %v1499 = vmul.f32 %v1498, 1.442695
  %v1500 = vpow.pop %v1499
  %v1501 = vadd.f32 %v1500, 1.0
  %v1502 = vrcp.pop %v1501
  %v1503 = vmul.f32 1.0, %v1502
  %v1504 = vadd.f32 %v1491, %v376
  %v1506 = vrot.slane %v1504, 4
  %1507 = vrot.lane.b32.xlu0 %v1506, 96
  %v1508 = vpop.permute.xlu0 %1507
  %v1510 = vmul.f32 %v1503, %v1508
  %1512 = vrot.lane.b32.xlu0 %v1510, 32
  %v1513 = vpop.permute.xlu0 %1512
  %v1515 = vadd.f32 %v278, %v1513
  %v1516 = vtanh.pop %v1515
  %v1518 = vrot.slane %v1516, 4
  %v1520 = vsub.f32 %v1303, %v1518
  %v1522 = vrot.slane %v1520, 4
  %1523 = vrot.lane.b32.xlu0 %v1522, 112
  %v1524 = vpop.permute.xlu0 %1523
  %v1526 = vmul.f32 %v1503, %v1524
  %1528 = vrot.lane.b32.xlu0 %v1526, 16
  %v1529 = vpop.permute.xlu0 %1528
  %v1531 = vadd.f32 %v1516, %v1529
  %v1533 = vrot.slane %v1418, 4
  %1534 = vrot.lane.b32.xlu0 %v1533, 48
  %v1535 = vpop.permute.xlu0 %1534
  %v1536 = vsel %vm136, %v1535, 0
  %1538 = vmatprep.subr.mxu0 0.0
  %1539 = vmatpush1.msra.mxu0 0.0
  %1540 = vmatprep.subr.mxu0 0.0
  %1541 = vmatpush1.msra.mxu0 0.0
  %1542 = vmatprep.subr.mxu0 0.0
  %1543 = vmatpush1.msra.mxu0 0.0
  %1544 = vmatprep.subr.mxu0 0.0
  %1545 = vmatpush1.msra.mxu0 0.0
  %1546 = vmatprep.subr.mxu0 0.0
  %1547 = vmatpush1.msra.mxu0 0.0
  %1548 = vmatprep.subr.mxu0 0.0
  %1549 = vmatpush1.msra.mxu0 0.0
  %1550 = vmatprep.subr.mxu0 0.0
  %1551 = vmatpush1.msra.mxu0 0.0
  %1552 = vmatprep.subr.mxu0 0.0
  %1553 = vmatpush1.msra.mxu0 0.0
  %1554 = vmatprep.subr.mxu0 0.0
  %1555 = vmatpush1.msra.mxu0 0.0
  %1556 = vmatprep.subr.mxu0 0.0
  %1557 = vmatpush1.msra.mxu0 0.0
  %1558 = vmatprep.subr.mxu0 0.0
  %1559 = vmatpush1.msra.mxu0 0.0
  %1560 = vmatprep.subr.mxu0 0.0
  %1561 = vmatpush1.msra.mxu0 0.0
  %1562 = vmatprep.subr.mxu0 0.0
  %1563 = vmatpush1.msra.mxu0 0.0
  %1564 = vmatprep.subr.mxu0 0.0
  %1565 = vmatpush1.msra.mxu0 0.0
  %1566 = vmatprep.subr.mxu0 0.0
  %1567 = vmatpush1.msra.mxu0 %v287
  %1568 = vmatprep.subr.mxu0 0.0
  %1569 = vmatpush1.msra.mxu0 %v286
  %1570 = vmatprep.subr.mxu0 0.0
  %1571 = vmatpush2.msra.mxu0 0.0
  %1572 = vmatprep.subr.mxu0 0.0
  %1573 = vmatpush2.msra.mxu0 0.0
  %1574 = vmatprep.subr.mxu0 0.0
  %1575 = vmatpush2.msra.mxu0 0.0
  %1576 = vmatprep.subr.mxu0 0.0
  %1577 = vmatpush2.msra.mxu0 0.0
  %1578 = vmatprep.subr.mxu0 0.0
  %1579 = vmatpush2.msra.mxu0 0.0
  %1580 = vmatprep.subr.mxu0 0.0
  %1581 = vmatpush2.msra.mxu0 0.0
  %1582 = vmatprep.subr.mxu0 0.0
  %1583 = vmatpush2.msra.mxu0 0.0
  %1584 = vmatprep.subr.mxu0 0.0
  %1585 = vmatpush2.msra.mxu0 0.0
  %1586 = vmatprep.subr.mxu0 0.0
  %1587 = vmatpush2.msra.mxu0 0.0
  %1588 = vmatprep.subr.mxu0 0.0
  %1589 = vmatpush2.msra.mxu0 0.0
  %1590 = vmatprep.subr.mxu0 0.0
  %1591 = vmatpush2.msra.mxu0 0.0
  %1592 = vmatprep.subr.mxu0 0.0
  %1593 = vmatpush2.msra.mxu0 0.0
  %1594 = vmatprep.subr.mxu0 0.0
  %1595 = vmatpush2.msra.mxu0 0.0
  %1596 = vmatprep.subr.mxu0 0.0
  %1597 = vmatpush2.msra.mxu0 0.0
  %1598 = vmatprep.subr.mxu0 0.0
  %1599 = vmatpush2.msra.mxu0 0.0
  %1600 = vmatprep.subr.mxu0 0.0
  %1601 = vmatpush2.msra.mxu0 0.0
  %1602 = vmatprep.mubr.f32.mxu0 0.0
  %1603 = vmatmul.mubr.f32.gmra.mxu0 %v1536
  %v1604 = vpop.f32.mrf.mxu0
  %v1605 = vadd.f32 0.0, %v1604
  %v1606 = vpop.f32.mrf.mxu0
  %1607 = vdwg.mxu0
  %1609 = vrot.lane.b32.xlu0 %v1605, 48
  %v1610 = vpop.permute.xlu0 %1609
  %v1612 = vadd.f32 %v273, %v1610
  %v1613 = vxor.u32 %v1612, 2147483648
  %v1614 = vmul.f32 %v1613, 1.442695
  %v1615 = vpow.pop %v1614
  %v1616 = vadd.f32 %v1615, 1.0
  %v1617 = vrcp.pop %v1616
  %v1618 = vmul.f32 1.0, %v1617
  %v1619 = vadd.f32 %v1605, %v489
  %1621 = vrot.lane.b32.xlu0 %v1619, 16
  %v1622 = vpop.permute.xlu0 %1621
  %v1624 = vmul.f32 %v1618, %v1622
  %1626 = vrot.lane.b32.xlu0 %v1624, 32
  %v1627 = vpop.permute.xlu0 %1626
  %v1629 = vadd.f32 %v273, %v1627
  %v1630 = vtanh.pop %v1629
  %v1632 = vrot.slane %v1630, 4
  %v1634 = vsub.f32 %v1418, %v1632
  %v1636 = vrot.slane %v1634, 4
  %1637 = vrot.lane.b32.xlu0 %v1636, 112
  %v1638 = vpop.permute.xlu0 %1637
  %v1640 = vmul.f32 %v1618, %v1638
  %1642 = vrot.lane.b32.xlu0 %v1640, 16
  %v1643 = vpop.permute.xlu0 %1642
  %v1645 = vadd.f32 %v1630, %v1643
  %v1647 = vrot.slane %v1531, 4
  %1648 = vrot.lane.b32.xlu0 %v1647, 96
  %v1649 = vpop.permute.xlu0 %1648
  %v1650 = vsel %vm136, %v1649, 0
  %1652 = vmatprep.subr.mxu0 0.0
  %1653 = vmatpush1.msra.mxu0 0.0
  %1654 = vmatprep.subr.mxu0 0.0
  %1655 = vmatpush1.msra.mxu0 0.0
  %1656 = vmatprep.subr.mxu0 0.0
  %1657 = vmatpush1.msra.mxu0 0.0
  %1658 = vmatprep.subr.mxu0 0.0
  %1659 = vmatpush1.msra.mxu0 0.0
  %1660 = vmatprep.subr.mxu0 0.0
  %1661 = vmatpush1.msra.mxu0 0.0
  %1662 = vmatprep.subr.mxu0 0.0
  %1663 = vmatpush1.msra.mxu0 0.0
  %1664 = vmatprep.subr.mxu0 0.0
  %1665 = vmatpush1.msra.mxu0 0.0
  %1666 = vmatprep.subr.mxu0 0.0
  %1667 = vmatpush1.msra.mxu0 0.0
  %1668 = vmatprep.subr.mxu0 0.0
  %1669 = vmatpush1.msra.mxu0 0.0
  %1670 = vmatprep.subr.mxu0 0.0
  %1671 = vmatpush1.msra.mxu0 0.0
  %1672 = vmatprep.subr.mxu0 0.0
  %1673 = vmatpush1.msra.mxu0 0.0
  %1674 = vmatprep.subr.mxu0 0.0
  %1675 = vmatpush1.msra.mxu0 0.0
  %1676 = vmatprep.subr.mxu0 0.0
  %1677 = vmatpush1.msra.mxu0 0.0
  %1678 = vmatprep.subr.mxu0 0.0
  %1679 = vmatpush1.msra.mxu0 0.0
  %1680 = vmatprep.subr.mxu0 0.0
  %1681 = vmatpush1.msra.mxu0 %v285
  %1682 = vmatprep.subr.mxu0 0.0
  %1683 = vmatpush1.msra.mxu0 %v284
  %1684 = vmatprep.subr.mxu0 0.0
  %1685 = vmatpush2.msra.mxu0 0.0
  %1686 = vmatprep.subr.mxu0 0.0
  %1687 = vmatpush2.msra.mxu0 0.0
  %1688 = vmatprep.subr.mxu0 0.0
  %1689 = vmatpush2.msra.mxu0 0.0
  %1690 = vmatprep.subr.mxu0 0.0
  %1691 = vmatpush2.msra.mxu0 0.0
  %1692 = vmatprep.subr.mxu0 0.0
  %1693 = vmatpush2.msra.mxu0 0.0
  %1694 = vmatprep.subr.mxu0 0.0
  %1695 = vmatpush2.msra.mxu0 0.0
  %1696 = vmatprep.subr.mxu0 0.0
  %1697 = vmatpush2.msra.mxu0 0.0
  %1698 = vmatprep.subr.mxu0 0.0
  %1699 = vmatpush2.msra.mxu0 0.0
  %1700 = vmatprep.subr.mxu0 0.0
  %1701 = vmatpush2.msra.mxu0 0.0
  %1702 = vmatprep.subr.mxu0 0.0
  %1703 = vmatpush2.msra.mxu0 0.0
  %1704 = vmatprep.subr.mxu0 0.0
  %1705 = vmatpush2.msra.mxu0 0.0
  %1706 = vmatprep.subr.mxu0 0.0
  %1707 = vmatpush2.msra.mxu0 0.0
  %1708 = vmatprep.subr.mxu0 0.0
  %1709 = vmatpush2.msra.mxu0 0.0
  %1710 = vmatprep.subr.mxu0 0.0
  %1711 = vmatpush2.msra.mxu0 0.0
  %1712 = vmatprep.subr.mxu0 0.0
  %1713 = vmatpush2.msra.mxu0 0.0
  %1714 = vmatprep.subr.mxu0 0.0
  %1715 = vmatpush2.msra.mxu0 0.0
  %1716 = vmatprep.mubr.f32.mxu0 0.0
  %1717 = vmatmul.mubr.f32.gmra.mxu0 %v1650
  %v1718 = vpop.f32.mrf.mxu0
  %v1719 = vadd.f32 0.0, %v1718
  %v1720 = vpop.f32.mrf.mxu0
  %1721 = vdwg.mxu0
  %v1722 = vadd.f32 %v281, %v1719
  %v1723 = vxor.u32 %v1722, 2147483648
  %v1724 = vmul.f32 %v1723, 1.442695
  %v1725 = vpow.pop %v1724
  %v1726 = vadd.f32 %v1725, 1.0
  %v1727 = vrcp.pop %v1726
  %v1728 = vmul.f32 1.0, %v1727
  %v1729 = vadd.f32 %v1719, %v376
  %1731 = vrot.lane.b32.xlu0 %v1729, 96
  %v1732 = vpop.permute.xlu0 %1731
  %v1734 = vmul.f32 %v1728, %v1732
  %1736 = vrot.lane.b32.xlu0 %v1734, 32
  %v1737 = vpop.permute.xlu0 %1736
  %v1739 = vadd.f32 %v281, %v1737
  %v1740 = vtanh.pop %v1739
  %v1742 = vrot.slane %v1740, 4
  %v1744 = vsub.f32 %v1531, %v1742
  %v1746 = vrot.slane %v1744, 4
  %1747 = vrot.lane.b32.xlu0 %v1746, 112
  %v1748 = vpop.permute.xlu0 %1747
  %v1750 = vmul.f32 %v1728, %v1748
  %1752 = vrot.lane.b32.xlu0 %v1750, 16
  %v1753 = vpop.permute.xlu0 %1752
  %v1755 = vadd.f32 %v1740, %v1753
  %1757 = vrot.lane.b32.xlu0 %v1645, 48
  %v1758 = vpop.permute.xlu0 %1757
  %v1759 = vsel %vm136, %v1758, 0
  %1761 = vmatprep.subr.mxu0 0.0
  %1762 = vmatpush1.msra.mxu0 0.0
  %1763 = vmatprep.subr.mxu0 0.0
  %1764 = vmatpush1.msra.mxu0 0.0
  %1765 = vmatprep.subr.mxu0 0.0
  %1766 = vmatpush1.msra.mxu0 0.0
  %1767 = vmatprep.subr.mxu0 0.0
  %1768 = vmatpush1.msra.mxu0 0.0
  %1769 = vmatprep.subr.mxu0 0.0
  %1770 = vmatpush1.msra.mxu0 0.0
  %1771 = vmatprep.subr.mxu0 0.0
  %1772 = vmatpush1.msra.mxu0 0.0
  %1773 = vmatprep.subr.mxu0 0.0
  %1774 = vmatpush1.msra.mxu0 0.0
  %1775 = vmatprep.subr.mxu0 0.0
  %1776 = vmatpush1.msra.mxu0 0.0
  %1777 = vmatprep.subr.mxu0 0.0
  %1778 = vmatpush1.msra.mxu0 0.0
  %1779 = vmatprep.subr.mxu0 0.0
  %1780 = vmatpush1.msra.mxu0 0.0
  %1781 = vmatprep.subr.mxu0 0.0
  %1782 = vmatpush1.msra.mxu0 0.0
  %1783 = vmatprep.subr.mxu0 0.0
  %1784 = vmatpush1.msra.mxu0 0.0
  %1785 = vmatprep.subr.mxu0 0.0
  %1786 = vmatpush1.msra.mxu0 0.0
  %1787 = vmatprep.subr.mxu0 0.0
  %1788 = vmatpush1.msra.mxu0 0.0
  %1789 = vmatprep.subr.mxu0 0.0
  %1790 = vmatpush1.msra.mxu0 %v287
  %1791 = vmatprep.subr.mxu0 0.0
  %1792 = vmatpush1.msra.mxu0 %v286
  %1793 = vmatprep.subr.mxu0 0.0
  %1794 = vmatpush2.msra.mxu0 0.0
  %1795 = vmatprep.subr.mxu0 0.0
  %1796 = vmatpush2.msra.mxu0 0.0
  %1797 = vmatprep.subr.mxu0 0.0
  %1798 = vmatpush2.msra.mxu0 0.0
  %1799 = vmatprep.subr.mxu0 0.0
  %1800 = vmatpush2.msra.mxu0 0.0
  %1801 = vmatprep.subr.mxu0 0.0
  %1802 = vmatpush2.msra.mxu0 0.0
  %1803 = vmatprep.subr.mxu0 0.0
  %1804 = vmatpush2.msra.mxu0 0.0
  %1805 = vmatprep.subr.mxu0 0.0
  %1806 = vmatpush2.msra.mxu0 0.0
  %1807 = vmatprep.subr.mxu0 0.0
  %1808 = vmatpush2.msra.mxu0 0.0
  %1809 = vmatprep.subr.mxu0 0.0
  %1810 = vmatpush2.msra.mxu0 0.0
  %1811 = vmatprep.subr.mxu0 0.0
  %1812 = vmatpush2.msra.mxu0 0.0
  %1813 = vmatprep.subr.mxu0 0.0
  %1814 = vmatpush2.msra.mxu0 0.0
  %1815 = vmatprep.subr.mxu0 0.0
  %1816 = vmatpush2.msra.mxu0 0.0
  %1817 = vmatprep.subr.mxu0 0.0
  %1818 = vmatpush2.msra.mxu0 0.0
  %1819 = vmatprep.subr.mxu0 0.0
  %1820 = vmatpush2.msra.mxu0 0.0
  %1821 = vmatprep.subr.mxu0 0.0
  %1822 = vmatpush2.msra.mxu0 0.0
  %1823 = vmatprep.subr.mxu0 0.0
  %1824 = vmatpush2.msra.mxu0 0.0
  %1825 = vmatprep.mubr.f32.mxu0 0.0
  %1826 = vmatmul.mubr.f32.gmra.mxu0 %v1759
  %v1827 = vpop.f32.mrf.mxu0
  %v1828 = vadd.f32 0.0, %v1827
  %v1829 = vpop.f32.mrf.mxu0
  %1830 = vdwg.mxu0
  %v1832 = vrot.slane %v1828, 4
  %1833 = vrot.lane.b32.xlu0 %v1832, 48
  %v1834 = vpop.permute.xlu0 %1833
  %v1836 = vadd.f32 %v270, %v1834
  %v1837 = vxor.u32 %v1836, 2147483648
  %v1838 = vmul.f32 %v1837, 1.442695
  %v1839 = vpow.pop %v1838
  %v1840 = vadd.f32 %v1839, 1.0
  %v1841 = vrcp.pop %v1840
  %v1842 = vmul.f32 1.0, %v1841
  %v1843 = vadd.f32 %v1828, %v489
  %v1845 = vrot.slane %v1843, 4
  %1846 = vrot.lane.b32.xlu0 %v1845, 16
  %v1847 = vpop.permute.xlu0 %1846
  %v1849 = vmul.f32 %v1842, %v1847
  %1851 = vrot.lane.b32.xlu0 %v1849, 32
  %v1852 = vpop.permute.xlu0 %1851
  %v1854 = vadd.f32 %v270, %v1852
  %v1855 = vtanh.pop %v1854
  %v1857 = vrot.slane %v1855, 4
  %v1859 = vsub.f32 %v1645, %v1857
  %v1861 = vrot.slane %v1859, 4
  %1862 = vrot.lane.b32.xlu0 %v1861, 112
  %v1863 = vpop.permute.xlu0 %1862
  %v1865 = vmul.f32 %v1842, %v1863
  %1867 = vrot.lane.b32.xlu0 %v1865, 16
  %v1868 = vpop.permute.xlu0 %1867
  %v1870 = vadd.f32 %v1855, %v1868
  %1872 = vrot.lane.b32.xlu0 %v1755, 96
  %v1873 = vpop.permute.xlu0 %1872
  %v1874 = vsel %vm136, %v1873, 0
  %1876 = vmatprep.subr.mxu0 0.0
  %1877 = vmatpush1.msra.mxu0 0.0
  %1878 = vmatprep.subr.mxu0 0.0
  %1879 = vmatpush1.msra.mxu0 0.0
  %1880 = vmatprep.subr.mxu0 0.0
  %1881 = vmatpush1.msra.mxu0 0.0
  %1882 = vmatprep.subr.mxu0 0.0
  %1883 = vmatpush1.msra.mxu0 0.0
  %1884 = vmatprep.subr.mxu0 0.0
  %1885 = vmatpush1.msra.mxu0 0.0
  %1886 = vmatprep.subr.mxu0 0.0
  %1887 = vmatpush1.msra.mxu0 0.0
  %1888 = vmatprep.subr.mxu0 0.0
  %1889 = vmatpush1.msra.mxu0 0.0
  %1890 = vmatprep.subr.mxu0 0.0
  %1891 = vmatpush1.msra.mxu0 0.0
  %1892 = vmatprep.subr.mxu0 0.0
  %1893 = vmatpush1.msra.mxu0 0.0
  %1894 = vmatprep.subr.mxu0 0.0
  %1895 = vmatpush1.msra.mxu0 0.0
  %1896 = vmatprep.subr.mxu0 0.0
  %1897 = vmatpush1.msra.mxu0 0.0
  %1898 = vmatprep.subr.mxu0 0.0
  %1899 = vmatpush1.msra.mxu0 0.0
  %1900 = vmatprep.subr.mxu0 0.0
  %1901 = vmatpush1.msra.mxu0 0.0
  %1902 = vmatprep.subr.mxu0 0.0
  %1903 = vmatpush1.msra.mxu0 0.0
  %1904 = vmatprep.subr.mxu0 0.0
  %1905 = vmatpush1.msra.mxu0 %v285
  %1906 = vmatprep.subr.mxu0 0.0
  %1907 = vmatpush1.msra.mxu0 %v284
  %1908 = vmatprep.subr.mxu0 0.0
  %1909 = vmatpush2.msra.mxu0 0.0
  %1910 = vmatprep.subr.mxu0 0.0
  %1911 = vmatpush2.msra.mxu0 0.0
  %1912 = vmatprep.subr.mxu0 0.0
  %1913 = vmatpush2.msra.mxu0 0.0
  %1914 = vmatprep.subr.mxu0 0.0
  %1915 = vmatpush2.msra.mxu0 0.0
  %1916 = vmatprep.subr.mxu0 0.0
  %1917 = vmatpush2.msra.mxu0 0.0
  %1918 = vmatprep.subr.mxu0 0.0
  %1919 = vmatpush2.msra.mxu0 0.0
  %1920 = vmatprep.subr.mxu0 0.0
  %1921 = vmatpush2.msra.mxu0 0.0
  %1922 = vmatprep.subr.mxu0 0.0
  %1923 = vmatpush2.msra.mxu0 0.0
  %1924 = vmatprep.subr.mxu0 0.0
  %1925 = vmatpush2.msra.mxu0 0.0
  %1926 = vmatprep.subr.mxu0 0.0
  %1927 = vmatpush2.msra.mxu0 0.0
  %1928 = vmatprep.subr.mxu0 0.0
  %1929 = vmatpush2.msra.mxu0 0.0
  %1930 = vmatprep.subr.mxu0 0.0
  %1931 = vmatpush2.msra.mxu0 0.0
  %1932 = vmatprep.subr.mxu0 0.0
  %1933 = vmatpush2.msra.mxu0 0.0
  %1934 = vmatprep.subr.mxu0 0.0
  %1935 = vmatpush2.msra.mxu0 0.0
  %1936 = vmatprep.subr.mxu0 0.0
  %1937 = vmatpush2.msra.mxu0 0.0
  %1938 = vmatprep.subr.mxu0 0.0
  %1939 = vmatpush2.msra.mxu0 0.0
  %1940 = vmatprep.mubr.f32.mxu0 0.0
  %1941 = vmatmul.mubr.f32.gmra.mxu0 %v1874
  %v1942 = vpop.f32.mrf.mxu0
  %v1943 = vadd.f32 0.0, %v1942
  %v1944 = vpop.f32.mrf.mxu0
  %1945 = vdwg.mxu0
  %v1947 = vrot.slane %v1943, 4
  %v1949 = vadd.f32 %v281, %v1947
  %v1950 = vxor.u32 %v1949, 2147483648
  %v1951 = vmul.f32 %v1950, 1.442695
  %v1952 = vpow.pop %v1951
  %v1953 = vadd.f32 %v1952, 1.0
  %v1954 = vrcp.pop %v1953
  %v1955 = vmul.f32 1.0, %v1954
  %v1956 = vadd.f32 %v1943, %v376
  %v1958 = vrot.slane %v1956, 4
  %1959 = vrot.lane.b32.xlu0 %v1958, 96
  %v1960 = vpop.permute.xlu0 %1959
  %v1962 = vmul.f32 %v1955, %v1960
  %1964 = vrot.lane.b32.xlu0 %v1962, 32
  %v1965 = vpop.permute.xlu0 %1964
  %v1967 = vadd.f32 %v281, %v1965
  %v1968 = vtanh.pop %v1967
  %v1970 = vrot.slane %v1968, 4
  %v1972 = vsub.f32 %v1755, %v1970
  %v1974 = vrot.slane %v1972, 4
  %1975 = vrot.lane.b32.xlu0 %v1974, 112
  %v1976 = vpop.permute.xlu0 %1975
  %v1978 = vmul.f32 %v1955, %v1976
  %1980 = vrot.lane.b32.xlu0 %v1978, 16
  %v1981 = vpop.permute.xlu0 %1980
  %v1983 = vadd.f32 %v1968, %v1981
  %v1985 = vrot.slane %v1870, 4
  %1986 = vrot.lane.b32.xlu0 %v1985, 48
  %v1987 = vpop.permute.xlu0 %1986
  %v1988 = vsel %vm136, %v1987, 0
  %1990 = vmatprep.subr.mxu0 0.0
  %1991 = vmatpush1.msra.mxu0 0.0
  %1992 = vmatprep.subr.mxu0 0.0
  %1993 = vmatpush1.msra.mxu0 0.0
  %1994 = vmatprep.subr.mxu0 0.0
  %1995 = vmatpush1.msra.mxu0 0.0
  %1996 = vmatprep.subr.mxu0 0.0
  %1997 = vmatpush1.msra.mxu0 0.0
  %1998 = vmatprep.subr.mxu0 0.0
  %1999 = vmatpush1.msra.mxu0 0.0
  %2000 = vmatprep.subr.mxu0 0.0
  %2001 = vmatpush1.msra.mxu0 0.0
  %2002 = vmatprep.subr.mxu0 0.0
  %2003 = vmatpush1.msra.mxu0 0.0
  %2004 = vmatprep.subr.mxu0 0.0
  %2005 = vmatpush1.msra.mxu0 0.0
  %2006 = vmatprep.subr.mxu0 0.0
  %2007 = vmatpush1.msra.mxu0 0.0
  %2008 = vmatprep.subr.mxu0 0.0
  %2009 = vmatpush1.msra.mxu0 0.0
  %2010 = vmatprep.subr.mxu0 0.0
  %2011 = vmatpush1.msra.mxu0 0.0
  %2012 = vmatprep.subr.mxu0 0.0
  %2013 = vmatpush1.msra.mxu0 0.0
  %2014 = vmatprep.subr.mxu0 0.0
  %2015 = vmatpush1.msra.mxu0 0.0
  %2016 = vmatprep.subr.mxu0 0.0
  %2017 = vmatpush1.msra.mxu0 0.0
  %2018 = vmatprep.subr.mxu0 0.0
  %2019 = vmatpush1.msra.mxu0 %v287
  %2020 = vmatprep.subr.mxu0 0.0
  %2021 = vmatpush1.msra.mxu0 %v286
  %2022 = vmatprep.subr.mxu0 0.0
  %2023 = vmatpush2.msra.mxu0 0.0
  %2024 = vmatprep.subr.mxu0 0.0
  %2025 = vmatpush2.msra.mxu0 0.0
  %2026 = vmatprep.subr.mxu0 0.0
  %2027 = vmatpush2.msra.mxu0 0.0
  %2028 = vmatprep.subr.mxu0 0.0
  %2029 = vmatpush2.msra.mxu0 0.0
  %2030 = vmatprep.subr.mxu0 0.0
  %2031 = vmatpush2.msra.mxu0 0.0
  %2032 = vmatprep.subr.mxu0 0.0
  %2033 = vmatpush2.msra.mxu0 0.0
  %2034 = vmatprep.subr.mxu0 0.0
  %2035 = vmatpush2.msra.mxu0 0.0
  %2036 = vmatprep.subr.mxu0 0.0
  %2037 = vmatpush2.msra.mxu0 0.0
  %2038 = vmatprep.subr.mxu0 0.0
  %2039 = vmatpush2.msra.mxu0 0.0
  %2040 = vmatprep.subr.mxu0 0.0
  %2041 = vmatpush2.msra.mxu0 0.0
  %2042 = vmatprep.subr.mxu0 0.0
  %2043 = vmatpush2.msra.mxu0 0.0
  %2044 = vmatprep.subr.mxu0 0.0
  %2045 = vmatpush2.msra.mxu0 0.0
  %2046 = vmatprep.subr.mxu0 0.0
  %2047 = vmatpush2.msra.mxu0 0.0
  %2048 = vmatprep.subr.mxu0 0.0
  %2049 = vmatpush2.msra.mxu0 0.0
  %2050 = vmatprep.subr.mxu0 0.0
  %2051 = vmatpush2.msra.mxu0 0.0
  %2052 = vmatprep.subr.mxu0 0.0
  %2053 = vmatpush2.msra.mxu0 0.0
  %2054 = vmatprep.mubr.f32.mxu0 0.0
  %2055 = vmatmul.mubr.f32.gmra.mxu0 %v1988
  %v2056 = vpop.f32.mrf.mxu0
  %v2057 = vadd.f32 0.0, %v2056
  %v2058 = vpop.f32.mrf.mxu0
  %2059 = vdwg.mxu0
  %2061 = vrot.lane.b32.xlu0 %v2057, 48
  %v2062 = vpop.permute.xlu0 %2061
  %v2064 = vadd.f32 %v270, %v2062
  %v2065 = vxor.u32 %v2064, 2147483648
  %v2066 = vmul.f32 %v2065, 1.442695
  %v2067 = vpow.pop %v2066
  %v2068 = vadd.f32 %v2067, 1.0
  %v2069 = vrcp.pop %v2068
  %v2070 = vmul.f32 1.0, %v2069
  %v2071 = vadd.f32 %v2057, %v489
  %2073 = vrot.lane.b32.xlu0 %v2071, 16
  %v2074 = vpop.permute.xlu0 %2073
  %v2076 = vmul.f32 %v2070, %v2074
  %2078 = vrot.lane.b32.xlu0 %v2076, 32
  %v2079 = vpop.permute.xlu0 %2078
  %v2081 = vadd.f32 %v270, %v2079
  %v2082 = vtanh.pop %v2081
  %v2084 = vrot.slane %v2082, 4
  %v2086 = vsub.f32 %v1870, %v2084
  %v2088 = vrot.slane %v2086, 4
  %2089 = vrot.lane.b32.xlu0 %v2088, 112
  %v2090 = vpop.permute.xlu0 %2089
  %v2092 = vmul.f32 %v2070, %v2090
  %2094 = vrot.lane.b32.xlu0 %v2092, 16
  %v2095 = vpop.permute.xlu0 %2094
  %v2097 = vadd.f32 %v2082, %v2095
  %2100 = vrot.lane.b32.xlu0 %v2097, 64
  %v2101 = vpop.permute.xlu0 %2100
  %v2103 = vsel %vm136, %v517, %v2101
  %2104 = vrot.lane.b32.xlu0 %v627, 96
  %v2105 = vpop.permute.xlu0 %2104
  %2107 = vrot.lane.b32.xlu0 %v1870, 64
  %v2108 = vpop.permute.xlu0 %2107
  %v2110 = vsel %vm136, %v2105, %v2108
  %2112 = vrot.lane.b32.xlu0 %v1645, 64
  %v2113 = vpop.permute.xlu0 %2112
  %v2115 = vsel %vm136, %v969, %v2113
  %2116 = vrot.lane.b32.xlu0 %v1079, 96
  %v2117 = vpop.permute.xlu0 %2116
  %2119 = vrot.lane.b32.xlu0 %v1418, 64
  %v2120 = vpop.permute.xlu0 %2119
  %v2122 = vsel %vm136, %v2117, %v2120
  %2124 = vrot.lane.b32.xlu0 %v1193, 64
  %v2125 = vpop.permute.xlu0 %2124
  %v2127 = vsel %vm136, %v1421, %v2125
  %2128 = vrot.lane.b32.xlu0 %v1531, 96
  %v2129 = vpop.permute.xlu0 %2128
  %2131 = vrot.lane.b32.xlu0 %v966, 64
  %v2132 = vpop.permute.xlu0 %2131
  %v2134 = vsel %vm136, %v2129, %v2132
  %2136 = vrot.lane.b32.xlu0 %v741, 64
  %v2137 = vpop.permute.xlu0 %2136
  %v2139 = vsel %vm136, %v1873, %v2137
  %2141 = vrot.lane.b32.xlu0 %v1983, 96
  %v2142 = vpop.permute.xlu0 %2141
  %2144 = vrot.lane.b32.xlu0 %v514, 64
  %v2145 = vpop.permute.xlu0 %2144
  %v2147 = vsel %vm136, %v2142, %v2145
  %vm2148 = vcmask 1043456
  %v2149 = vsel %vm2148, %v2103, %v2110
  %v2150 = vsel %vm2148, %v2115, %v2122
  %v2151 = vsel %vm2148, %v2127, %v2134
  %v2152 = vsel %vm2148, %v2139, %v2147
  %v2153 = vmax.f32 %v2149, 0.0
  %v2154 = vmax.f32 %v2150, 0.0
  %v2155 = vmax.f32 %v2151, 0.0
  %v2156 = vmax.f32 %v2152, 0.0
  %2157 = vst.msk [vmem:[%s11] sm:$0xff] %vm76, %v2153
  %2158 = vst.msk [vmem:[%s11 + $0x8] sm:$0xff] %vm76, %v2154
  %2159 = vst.msk [vmem:[%s11 + $0x10] sm:$0xff] %vm76, %v2155
  %2160 = vst.msk [vmem:[%s11 + $0x18] sm:$0xff] %vm76, %v2156
  // Predicated region
  $region46: #{coordnet_forward.1} parent=0 // pred_check
    _
  $region47: #{coordnet_forward.1} parent=0 // pred_check_branch
    %2162 = sbr.rel (0) target = $region49
  $region48: #{coordnet_forward.1} parent=0 // pred_region
    _
  $region49: #{coordnet_forward.1} parent=0 // pred_fallthru
    _
  // Predicated region
  $region50: #{coordnet_forward.1} parent=0 // pred_check
    _
  $region51: #{coordnet_forward.1} parent=0 // pred_check_branch
    %2164 = sbr.rel (0) target = $region53
  $region52: #{coordnet_forward.1} parent=0 // pred_region
    _
  $region53: #{coordnet_forward.1} parent=0 // pred_fallthru
    _

</llo_original>
